<compile_context>
chip_gen: v7x
topology: tpu7x:2x2x1
jax: 0.10.0
libtpu: 0.0.40
codegen_flags: <defaults>
</compile_context>

<pallas_src>
import functools

import jax
import jax.numpy as jnp
import numpy as np
from jax import lax
from jax.experimental import pallas as pl
from jax.experimental.pallas import tpu as pltpu

_Q_TILE = 128  # queue column tile / l_pos block width (lane-dense)


# ----------------------------------------------------------------------------
# Encoder kernel: both encoders + normalize + l_pos, single block.
# ----------------------------------------------------------------------------
def moco_encoder_kernel(
    pq_ref, pk_ref,
    cwq_ref, cbq_ref, fwq_ref, fbq_ref,
    cwk_ref, cbk_ref, fwk_ref, fbk_ref,
    lpos_ref, qn_ref, kn_ref,
    *, temp, n, hw,
):
    def encode(p_ref, cw_ref, cb_ref, fw_ref, fb_ref):
        # conv-as-matmul: (N*HW, C*9) bf16 @ (C*9, Cmid) bf16 -> f32 acc
        conv = jnp.dot(p_ref[...], cw_ref[...].astype(jnp.bfloat16),
                       preferred_element_type=jnp.float32)
        conv = jnp.maximum(conv + cb_ref[...], 0.0)            # bias + ReLU (f32)
        # global average pool: reshape + sublane reduce (XLU), no pool matrix
        pooled = jnp.sum(conv.reshape(n, hw, -1), axis=1) * (1.0 / hw)
        # FC: (N, Cmid) bf16 @ (Cmid, F) bf16 -> f32 acc, + bias
        return jnp.dot(pooled.astype(jnp.bfloat16), fw_ref[...].astype(jnp.bfloat16),
                       preferred_element_type=jnp.float32) + fb_ref[...]

    q = encode(pq_ref, cwq_ref, cbq_ref, fwq_ref, fbq_ref)
    k = encode(pk_ref, cwk_ref, cbk_ref, fwk_ref, fbk_ref)

    # torch.nn.functional.normalize(x, dim=1): x * rsqrt(max(sum(x*x), eps^2))
    eps2 = 1e-24
    qn = q * lax.rsqrt(jnp.maximum(jnp.sum(q * q, axis=1, keepdims=True), eps2))
    kn = k * lax.rsqrt(jnp.maximum(jnp.sum(k * k, axis=1, keepdims=True), eps2))

    qn_s = qn * (1.0 / temp)                       # fold 1/T into q once
    lpos = jnp.sum(qn_s * kn, axis=1, keepdims=True)          # (N, 1), f32
    lpos_ref[...] = jnp.broadcast_to(lpos, lpos_ref.shape)    # lane-dense block
    qn_ref[...] = qn_s.astype(jnp.bfloat16)                   # bf16 MXU operand
    kn_ref[...] = kn.astype(jnp.bfloat16)                     # enqueued keys


# ----------------------------------------------------------------------------
# Head kernel: gridded over queue column tiles; one lane-dense logits buffer.
#   j == 0           -> write the l_pos block (width _Q_TILE)
#   j in [1, tiles]  -> write l_neg tile j-1 = qn_scaled @ queue[:, tile j-1]
# ----------------------------------------------------------------------------
def moco_head_kernel(lpos_ref, qn_ref, queue_ref, out_ref):
    j = pl.program_id(0)

    @pl.when(j == 0)
    def _():
        out_ref[...] = lpos_ref[...]

    @pl.when(j > 0)
    def _():
        out_ref[...] = jnp.dot(qn_ref[...], queue_ref[...],
                               preferred_element_type=jnp.float32)


# ----------------------------------------------------------------------------
# Glue: im2col (bf16, unpadded) and parameter init.
# ----------------------------------------------------------------------------
def _im2col(img, dtype):
    n, c, h, w = img.shape
    patches = lax.conv_general_dilated_patches(
        img.astype(dtype), filter_shape=(3, 3), window_strides=(1, 1),
        padding="SAME")
    return jnp.transpose(patches, (0, 2, 3, 1)).reshape(n * h * w, c * 9)


def init_encoder_params(key, in_channels, mid_channels, feature_dim):
    k1, k2, k3, k4 = jax.random.split(key, 4)
    return {
        "conv_w": 0.1 * jax.random.normal(k1, (in_channels * 9, mid_channels),
                                          jnp.float32),
        "conv_b": 0.1 * jax.random.normal(k2, (1, mid_channels), jnp.float32),
        "fc_w": 0.1 * jax.random.normal(k3, (mid_channels, feature_dim),
                                        jnp.float32),
        "fc_b": 0.1 * jax.random.normal(k4, (1, feature_dim), jnp.float32),
    }


# ----------------------------------------------------------------------------
# MOCO forward (functional MOCO.forward + deq_enq side effect).
# `queue` is the persistent (feature_dim, queue_size) bf16 state (donated).
# ----------------------------------------------------------------------------
def moco_forward(img_q, img_k, params_q, params_k, queue, queue_ptr, temp):
    n, c, h, w = img_q.shape
    hw = h * w
    f_dim = params_q["fc_w"].shape[1]
    q_size = queue.shape[1]
    assert q_size % _Q_TILE == 0, "demo assumes queue_size % 128 == 0"
    num_tiles = q_size // _Q_TILE

    patches_q = _im2col(img_q, jnp.bfloat16)      # (N*HW, C*9) bf16, unpadded
    patches_k = _im2col(img_k, jnp.bfloat16)

    # --- Encoders + normalize + l_pos (single small pallas_call) -------------
    lpos_b, qn_s, kn = pl.pallas_call(
        functools.partial(moco_encoder_kernel, temp=temp, n=n, hw=hw),
        out_shape=(
            jax.ShapeDtypeStruct((n, _Q_TILE), jnp.float32),   # l_pos broadcast
            jax.ShapeDtypeStruct((n, f_dim), jnp.bfloat16),    # qn * (1/T)
            jax.ShapeDtypeStruct((n, f_dim), jnp.bfloat16),    # normalized keys
        ),
    )(patches_q, patches_k,
      params_q["conv_w"], params_q["conv_b"], params_q["fc_w"], params_q["fc_b"],
      params_k["conv_w"], params_k["conv_b"], params_k["fc_w"], params_k["fc_b"])

    # --- Head: gridded over queue column tiles, parallel across cores --------
    # VMEM budget derived from tile sizes (double-buffered) + headroom.
    head_vmem = 2 * (f_dim * _Q_TILE * 2     # queue tile, bf16
                     + n * _Q_TILE * 4       # logits tile, f32
                     + n * _Q_TILE * 4       # l_pos block, f32
                     + n * f_dim * 2)        # qn, bf16
    head_vmem = max(2 * head_vmem + (4 << 20), 16 * 1024 * 1024)

    logits_pad = pl.pallas_call(
        moco_head_kernel,
        grid=(1 + num_tiles,),
        in_specs=[
            pl.BlockSpec((n, _Q_TILE), lambda j: (0, 0)),               # l_pos
            pl.BlockSpec((n, f_dim), lambda j: (0, 0)),                 # qn
            pl.BlockSpec((f_dim, _Q_TILE),
                         lambda j: (0, jnp.maximum(j - 1, 0))),         # queue tile
        ],
        out_specs=pl.BlockSpec((n, _Q_TILE), lambda j: (0, j)),
        out_shape=jax.ShapeDtypeStruct((n, _Q_TILE + q_size), jnp.float32),
        compiler_params=pltpu.CompilerParams(
            dimension_semantics=("parallel",),
            vmem_limit_bytes=int(head_vmem)),
        cost_estimate=pl.CostEstimate(
            flops=2 * n * f_dim * q_size,
            transcendentals=0,
            bytes_accessed=f_dim * q_size * 2 + n * f_dim * 2
            + n * (q_size + 2 * _Q_TILE) * 4),
        # NOTE: at realistic queue sizes, add pipeline_mode=pl.Buffered(3) on
        # the queue BlockSpec if the tile DMA is exposed behind the matmul.
    )(lpos_b, qn_s, queue)

    # Single contiguous slice: column _Q_TILE-1 holds l_pos (broadcast),
    # columns [_Q_TILE, _Q_TILE+K) hold l_neg.  No concat, no masked stores.
    logits = logits_pad[:, _Q_TILE - 1:]                 # (N, 1 + K), already /T
    labels = jnp.zeros((n,), dtype=jnp.int32)            # torch uses int64

    # --- deq_enq (exact PyTorch end-clip semantics, window-only writes) ------
    #   left = min(queue_size, ptr + N); queue[:, ptr:left] = k.T[:, :left-ptr]
    #   ptr  = (ptr + N) % queue_size
    start = jnp.minimum(queue_ptr, q_size - n)
    shift = queue_ptr - start
    k_t = jnp.roll(kn.T, shift, axis=1)                  # (F, N) bf16
    old_win = lax.dynamic_slice_in_dim(queue, start, n, axis=1)
    keep_old = jnp.arange(n)[None, :] < shift
    new_win = jnp.where(keep_old, old_win, k_t)
    new_queue = lax.dynamic_update_slice_in_dim(queue, new_win, start, axis=1)
    new_ptr = (queue_ptr + n) % q_size

    return logits, labels, new_queue, new_ptr


# ----------------------------------------------------------------------------
# Pure-JAX f32 reference (sanity check only).
# ----------------------------------------------------------------------------
def reference_forward(img_q, img_k, params_q, params_k, queue_f32, temp):
    def enc(img, p):
        n, c, h, w = img.shape
        patches = _im2col(img, jnp.float32)
        conv = jnp.maximum(patches @ p["conv_w"] + p["conv_b"], 0.0)
        pooled = conv.reshape(n, h * w, -1).mean(axis=1)
        return pooled @ p["fc_w"] + p["fc_b"]

    q = enc(img_q, params_q)
    k = enc(img_k, params_k)
    qn = q / jnp.maximum(jnp.linalg.norm(q, axis=1, keepdims=True), 1e-12)
    kn = k / jnp.maximum(jnp.linalg.norm(k, axis=1, keepdims=True), 1e-12)
    l_pos = jnp.sum(qn * kn, axis=1, keepdims=True)
    l_neg = qn @ queue_f32
    return jnp.concatenate([l_pos, l_neg], axis=1) / temp, kn


if __name__ == "__main__":
    # Small, deterministic configuration.
    batch = 2
    in_channels = 4
    spatial = 16
    mid_channels = 8
    feature_dim = 32
    queue_size = 256            # lane-dense demo size (spec default is 2000)
    momentum_coef = 0.999       # only used by momentum_update(), not forward()
    softmax_temp = 0.07

    root = jax.random.PRNGKey(0)
    k_imgq, k_imgk, k_encq, k_enck, k_queue = jax.random.split(root, 5)

    img_q = jax.random.normal(k_imgq, (batch, in_channels, spatial, spatial),
                              jnp.float32)
    img_k = jax.random.normal(k_imgk, (batch, in_channels, spatial, spatial),
                              jnp.float32)

    params_q = init_encoder_params(k_encq, in_channels, mid_channels, feature_dim)
    params_k = init_encoder_params(k_enck, in_channels, mid_channels, feature_dim)

    # register_buffer('queue', randn(feature_dim, queue_size)); normalize(dim=0)
    queue_f32 = jax.random.normal(k_queue, (feature_dim, queue_size), jnp.float32)
    queue_f32 = queue_f32 / jnp.maximum(
        jnp.sqrt(jnp.sum(queue_f32 * queue_f32, axis=0, keepdims=True)), 1e-12)
    # Persistent queue state kept in bf16 (perf: halves the streamed bytes of
    # the dominant l_neg operand; torch keeps f32 — see perf review).
    queue = queue_f32.astype(jnp.bfloat16)
    queue_ptr = jnp.int32(0)

    # Reference computed BEFORE the call (queue buffer is donated below); it
    # uses the same (bf16-quantized) queue values so only kernel error remains.
    with jax.default_matmul_precision("float32"):
        ref_logits, ref_kn = reference_forward(
            img_q, img_k, params_q, params_k,
            queue.astype(jnp.float32), softmax_temp)

    fwd = jax.jit(moco_forward, static_argnums=(6,), donate_argnums=(4,))
    logits, labels, new_queue, new_ptr = fwd(
        img_q, img_k, params_q, params_k, queue, queue_ptr, softmax_temp)
    jax.block_until_ready((logits, labels, new_queue, new_ptr))

    assert logits.shape == (batch, 1 + queue_size)
    assert labels.shape == (batch,)
    assert new_queue.shape == (feature_dim, queue_size)
    assert int(new_ptr) == (0 + batch) % queue_size

    # Compare on the cosine scale (logits * T): bf16 MXU operands give up to
    # ~1-2% cosine error worst case, so atol 5e-2 on [-1, 1] is a real check.
    np.testing.assert_allclose(np.asarray(logits) * softmax_temp,
                               np.asarray(ref_logits) * softmax_temp,
                               rtol=5e-2, atol=5e-2)
    # Enqueued normalized keys must land in columns [ptr, ptr+batch) = [0, 2).
    np.testing.assert_allclose(
        np.asarray(new_queue[:, :batch].astype(jnp.float32)),
        np.asarray(ref_kn.T), rtol=5e-2, atol=5e-2)

    print("KERNEL_OK")
</pallas_src>

<mosaic_0001>
module attributes {stable_mosaic.version = 11 : i64} {
  func.func @moco_encoder_kernel(%arg0: memref<512x36xbf16, #tpu.memory_space<vmem>>, %arg1: memref<512x36xbf16, #tpu.memory_space<vmem>>, %arg2: memref<36x8xf32, #tpu.memory_space<vmem>>, %arg3: memref<1x8xf32, #tpu.memory_space<vmem>>, %arg4: memref<8x32xf32, #tpu.memory_space<vmem>>, %arg5: memref<1x32xf32, #tpu.memory_space<vmem>>, %arg6: memref<36x8xf32, #tpu.memory_space<vmem>>, %arg7: memref<1x8xf32, #tpu.memory_space<vmem>>, %arg8: memref<8x32xf32, #tpu.memory_space<vmem>>, %arg9: memref<1x32xf32, #tpu.memory_space<vmem>>, %arg10: memref<2x128xf32, #tpu.memory_space<vmem>>, %arg11: memref<2x32xbf16, #tpu.memory_space<vmem>>, %arg12: memref<2x32xbf16, #tpu.memory_space<vmem>>) attributes {dimension_semantics = [], scalar_prefetch = 0 : i64, scratch_operands = 0 : i64, tpu.core_type = #tpu.core_type<tc>} {
    %c0 = arith.constant 0 : index
    %c0_0 = arith.constant 0 : index
    %0 = vector.load %arg0[%c0, %c0_0] : memref<512x36xbf16, #tpu.memory_space<vmem>>, vector<512x36xbf16>
    %c0_1 = arith.constant 0 : index
    %c0_2 = arith.constant 0 : index
    %1 = vector.load %arg2[%c0_1, %c0_2] : memref<36x8xf32, #tpu.memory_space<vmem>>, vector<36x8xf32>
    %2 = arith.truncf %1 : vector<36x8xf32> to vector<36x8xbf16>
    %cst = arith.constant dense<0.000000e+00> : vector<512x8xf32>
    %3 = tpu.matmul %0, %2, %cst {dimension_numbers = #tpu.dot_dimension_numbers<[1], [0], [0], [1], [0, 0, 1, 1], [], []>} : vector<512x36xbf16>, vector<36x8xbf16>, vector<512x8xf32> -> vector<512x8xf32>
    %c0_3 = arith.constant 0 : index
    %c0_4 = arith.constant 0 : index
    %4 = vector.load %arg3[%c0_3, %c0_4] : memref<1x8xf32, #tpu.memory_space<vmem>>, vector<1x8xf32>
    %5 = vector.broadcast %4 : vector<1x8xf32> to vector<512x8xf32>
    %6 = arith.addf %3, %5 : vector<512x8xf32>
    %cst_5 = arith.constant 0.000000e+00 : f32
    %7 = vector.broadcast %cst_5 : f32 to vector<512x8xf32>
    %8 = arith.maximumf %6, %7 : vector<512x8xf32>
    %9 = vector.shape_cast %8 : vector<512x8xf32> to vector<2x256x8xf32>
    %cst_6 = arith.constant dense<0.000000e+00> : vector<2x8xf32>
    %10 = vector.multi_reduction <add>, %9, %cst_6 [1] : vector<2x256x8xf32> to vector<2x8xf32>
    %cst_7 = arith.constant 3.906250e-03 : f32
    %11 = vector.broadcast %cst_7 : f32 to vector<2x8xf32>
    %12 = arith.mulf %10, %11 : vector<2x8xf32>
    %13 = arith.truncf %12 : vector<2x8xf32> to vector<2x8xbf16>
    %c0_8 = arith.constant 0 : index
    %c0_9 = arith.constant 0 : index
    %14 = vector.load %arg4[%c0_8, %c0_9] : memref<8x32xf32, #tpu.memory_space<vmem>>, vector<8x32xf32>
    %15 = arith.truncf %14 : vector<8x32xf32> to vector<8x32xbf16>
    %cst_10 = arith.constant dense<0.000000e+00> : vector<2x32xf32>
    %16 = tpu.matmul %13, %15, %cst_10 {dimension_numbers = #tpu.dot_dimension_numbers<[1], [0], [0], [1], [0, 0, 1, 1], [], []>} : vector<2x8xbf16>, vector<8x32xbf16>, vector<2x32xf32> -> vector<2x32xf32>
    %c0_11 = arith.constant 0 : index
    %c0_12 = arith.constant 0 : index
    %17 = vector.load %arg5[%c0_11, %c0_12] : memref<1x32xf32, #tpu.memory_space<vmem>>, vector<1x32xf32>
    %18 = vector.broadcast %17 : vector<1x32xf32> to vector<2x32xf32>
    %19 = arith.addf %16, %18 : vector<2x32xf32>
    %c0_13 = arith.constant 0 : index
    %c0_14 = arith.constant 0 : index
    %20 = vector.load %arg1[%c0_13, %c0_14] : memref<512x36xbf16, #tpu.memory_space<vmem>>, vector<512x36xbf16>
    %c0_15 = arith.constant 0 : index
    %c0_16 = arith.constant 0 : index
    %21 = vector.load %arg6[%c0_15, %c0_16] : memref<36x8xf32, #tpu.memory_space<vmem>>, vector<36x8xf32>
    %22 = arith.truncf %21 : vector<36x8xf32> to vector<36x8xbf16>
    %cst_17 = arith.constant dense<0.000000e+00> : vector<512x8xf32>
    %23 = tpu.matmul %20, %22, %cst_17 {dimension_numbers = #tpu.dot_dimension_numbers<[1], [0], [0], [1], [0, 0, 1, 1], [], []>} : vector<512x36xbf16>, vector<36x8xbf16>, vector<512x8xf32> -> vector<512x8xf32>
    %c0_18 = arith.constant 0 : index
    %c0_19 = arith.constant 0 : index
    %24 = vector.load %arg7[%c0_18, %c0_19] : memref<1x8xf32, #tpu.memory_space<vmem>>, vector<1x8xf32>
    %25 = vector.broadcast %24 : vector<1x8xf32> to vector<512x8xf32>
    %26 = arith.addf %23, %25 : vector<512x8xf32>
    %cst_20 = arith.constant 0.000000e+00 : f32
    %27 = vector.broadcast %cst_20 : f32 to vector<512x8xf32>
    %28 = arith.maximumf %26, %27 : vector<512x8xf32>
    %29 = vector.shape_cast %28 : vector<512x8xf32> to vector<2x256x8xf32>
    %cst_21 = arith.constant dense<0.000000e+00> : vector<2x8xf32>
    %30 = vector.multi_reduction <add>, %29, %cst_21 [1] : vector<2x256x8xf32> to vector<2x8xf32>
    %cst_22 = arith.constant 3.906250e-03 : f32
    %31 = vector.broadcast %cst_22 : f32 to vector<2x8xf32>
    %32 = arith.mulf %30, %31 : vector<2x8xf32>
    %33 = arith.truncf %32 : vector<2x8xf32> to vector<2x8xbf16>
    %c0_23 = arith.constant 0 : index
    %c0_24 = arith.constant 0 : index
    %34 = vector.load %arg8[%c0_23, %c0_24] : memref<8x32xf32, #tpu.memory_space<vmem>>, vector<8x32xf32>
    %35 = arith.truncf %34 : vector<8x32xf32> to vector<8x32xbf16>
    %cst_25 = arith.constant dense<0.000000e+00> : vector<2x32xf32>
    %36 = tpu.matmul %33, %35, %cst_25 {dimension_numbers = #tpu.dot_dimension_numbers<[1], [0], [0], [1], [0, 0, 1, 1], [], []>} : vector<2x8xbf16>, vector<8x32xbf16>, vector<2x32xf32> -> vector<2x32xf32>
    %c0_26 = arith.constant 0 : index
    %c0_27 = arith.constant 0 : index
    %37 = vector.load %arg9[%c0_26, %c0_27] : memref<1x32xf32, #tpu.memory_space<vmem>>, vector<1x32xf32>
    %38 = vector.broadcast %37 : vector<1x32xf32> to vector<2x32xf32>
    %39 = arith.addf %36, %38 : vector<2x32xf32>
    %40 = arith.mulf %19, %19 : vector<2x32xf32>
    %cst_28 = arith.constant dense<0.000000e+00> : vector<2xf32>
    %41 = vector.multi_reduction <add>, %40, %cst_28 [1] : vector<2x32xf32> to vector<2xf32>
    %42 = vector.shape_cast %41 : vector<2xf32> to vector<2x1xf32>
    %cst_29 = arith.constant 1.000000e-24 : f32
    %43 = vector.broadcast %cst_29 : f32 to vector<2x1xf32>
    %44 = arith.maximumf %42, %43 : vector<2x1xf32>
    %45 = math.rsqrt %44 : vector<2x1xf32>
    %46 = vector.broadcast %45 : vector<2x1xf32> to vector<2x32xf32>
    %47 = arith.mulf %19, %46 : vector<2x32xf32>
    %48 = arith.mulf %39, %39 : vector<2x32xf32>
    %cst_30 = arith.constant dense<0.000000e+00> : vector<2xf32>
    %49 = vector.multi_reduction <add>, %48, %cst_30 [1] : vector<2x32xf32> to vector<2xf32>
    %50 = vector.shape_cast %49 : vector<2xf32> to vector<2x1xf32>
    %cst_31 = arith.constant 1.000000e-24 : f32
    %51 = vector.broadcast %cst_31 : f32 to vector<2x1xf32>
    %52 = arith.maximumf %50, %51 : vector<2x1xf32>
    %53 = math.rsqrt %52 : vector<2x1xf32>
    %54 = vector.broadcast %53 : vector<2x1xf32> to vector<2x32xf32>
    %55 = arith.mulf %39, %54 : vector<2x32xf32>
    %cst_32 = arith.constant 14.2857141 : f32
    %56 = vector.broadcast %cst_32 : f32 to vector<2x32xf32>
    %57 = arith.mulf %47, %56 : vector<2x32xf32>
    %58 = arith.mulf %57, %55 : vector<2x32xf32>
    %cst_33 = arith.constant dense<0.000000e+00> : vector<2xf32>
    %59 = vector.multi_reduction <add>, %58, %cst_33 [1] : vector<2x32xf32> to vector<2xf32>
    %60 = vector.shape_cast %59 : vector<2xf32> to vector<2x1xf32>
    %61 = vector.shape_cast %60 : vector<2x1xf32> to vector<2x1xf32>
    %62 = vector.broadcast %61 : vector<2x1xf32> to vector<2x128xf32>
    %c0_34 = arith.constant 0 : index
    %c0_35 = arith.constant 0 : index
    %63 = vector.load %arg10[%c0_34, %c0_35] : memref<2x128xf32, #tpu.memory_space<vmem>>, vector<2x128xf32>
    tpu.vector_store %arg10[%c0_34, %c0_35], %62 {strides = array<i32>} : memref<2x128xf32, #tpu.memory_space<vmem>>, vector<2x128xf32>,
    %64 = arith.truncf %57 : vector<2x32xf32> to vector<2x32xbf16>
    %c0_36 = arith.constant 0 : index
    %c0_37 = arith.constant 0 : index
    %65 = vector.load %arg11[%c0_36, %c0_37] : memref<2x32xbf16, #tpu.memory_space<vmem>>, vector<2x32xbf16>
    tpu.vector_store %arg11[%c0_36, %c0_37], %64 {strides = array<i32>} : memref<2x32xbf16, #tpu.memory_space<vmem>>, vector<2x32xbf16>,
    %66 = arith.truncf %55 : vector<2x32xf32> to vector<2x32xbf16>
    %c0_38 = arith.constant 0 : index
    %c0_39 = arith.constant 0 : index
    %67 = vector.load %arg12[%c0_38, %c0_39] : memref<2x32xbf16, #tpu.memory_space<vmem>>, vector<2x32xbf16>
    tpu.vector_store %arg12[%c0_38, %c0_39], %66 {strides = array<i32>} : memref<2x32xbf16, #tpu.memory_space<vmem>>, vector<2x32xbf16>,
    return
  }
}

module attributes {stable_mosaic.version = 11 : i64} {
  func.func @moco_head_kernel(%arg0: i32, %arg1: memref<2x128xf32, #tpu.memory_space<vmem>>, %arg2: memref<2x32xbf16, #tpu.memory_space<vmem>>, %arg3: memref<32x128xbf16, #tpu.memory_space<vmem>>, %arg4: memref<2x128xf32, #tpu.memory_space<vmem>>) attributes {dimension_semantics = [#tpu.dimension_semantics<parallel>], iteration_bounds = array<i64: 3>, scalar_prefetch = 0 : i64, scratch_operands = 0 : i64, tpu.core_type = #tpu.core_type<tc>, window_params = [{pipeline_mode = #tpu.pipeline_mode<synchronous>, transform_indices = @transform_0, window_bounds = array<i64: 2, 128>}, {pipeline_mode = #tpu.pipeline_mode<synchronous>, transform_indices = @transform_1, window_bounds = array<i64: 2, 32>}, {transform_indices = @transform_2, window_bounds = array<i64: 32, 128>}, {transform_indices = @transform_3, window_bounds = array<i64: 2, 128>}]} {
    %c0_i32 = arith.constant 0 : i32
    %0 = arith.cmpi eq, %arg0, %c0_i32 : i32
    %1 = arith.extui %0 : i1 to i32
    %c0_i32_0 = arith.constant 0 : i32
    %2 = arith.cmpi ne, %1, %c0_i32_0 : i32
    scf.if %2 {
      %c0 = arith.constant 0 : index
      %c0_3 = arith.constant 0 : index
      %6 = vector.load %arg1[%c0, %c0_3] : memref<2x128xf32, #tpu.memory_space<vmem>>, vector<2x128xf32>
      %c0_4 = arith.constant 0 : index
      %c0_5 = arith.constant 0 : index
      %7 = vector.load %arg4[%c0_4, %c0_5] : memref<2x128xf32, #tpu.memory_space<vmem>>, vector<2x128xf32>
      tpu.vector_store %arg4[%c0_4, %c0_5], %6 {strides = array<i32>} : memref<2x128xf32, #tpu.memory_space<vmem>>, vector<2x128xf32>,
    } else {
    }
    %c0_i32_1 = arith.constant 0 : i32
    %3 = arith.cmpi sgt, %arg0, %c0_i32_1 : i32
    %4 = arith.extui %3 : i1 to i32
    %c0_i32_2 = arith.constant 0 : i32
    %5 = arith.cmpi ne, %4, %c0_i32_2 : i32
    scf.if %5 {
      %c0 = arith.constant 0 : index
      %c0_3 = arith.constant 0 : index
      %6 = vector.load %arg2[%c0, %c0_3] : memref<2x32xbf16, #tpu.memory_space<vmem>>, vector<2x32xbf16>
      %c0_4 = arith.constant 0 : index
      %c0_5 = arith.constant 0 : index
      %7 = vector.load %arg3[%c0_4, %c0_5] : memref<32x128xbf16, #tpu.memory_space<vmem>>, vector<32x128xbf16>
      %cst = arith.constant dense<0.000000e+00> : vector<2x128xf32>
      %8 = tpu.matmul %6, %7, %cst {dimension_numbers = #tpu.dot_dimension_numbers<[1], [0], [0], [1], [0, 0, 1, 1], [], []>} : vector<2x32xbf16>, vector<32x128xbf16>, vector<2x128xf32> -> vector<2x128xf32>
      %c0_6 = arith.constant 0 : index
      %c0_7 = arith.constant 0 : index
      %9 = vector.load %arg4[%c0_6, %c0_7] : memref<2x128xf32, #tpu.memory_space<vmem>>, vector<2x128xf32>
      tpu.vector_store %arg4[%c0_6, %c0_7], %8 {strides = array<i32>} : memref<2x128xf32, #tpu.memory_space<vmem>>, vector<2x128xf32>,
    } else {
    }
    return
  }
  func.func @transform_0(%arg0: i32) -> (i32, i32) {
    %c0_i32 = arith.constant 0 : i32
    %c0_i32_0 = arith.constant 0 : i32
    %c0_i32_1 = arith.constant 0 : i32
    return %c0_i32, %c0_i32_0 : i32, i32
  }
  func.func @transform_1(%arg0: i32) -> (i32, i32) {
    %c0_i32 = arith.constant 0 : i32
    %c0_i32_0 = arith.constant 0 : i32
    %c0_i32_1 = arith.constant 0 : i32
    return %c0_i32, %c0_i32_0 : i32, i32
  }
  func.func @transform_2(%arg0: i32) -> (i32, i32) {
    %c1_i32 = arith.constant 1 : i32
    %0 = arith.subi %arg0, %c1_i32 : i32
    %c0_i32 = arith.constant 0 : i32
    %1 = arith.maxsi %0, %c0_i32 : i32
    %c0_i32_0 = arith.constant 0 : i32
    %c0_i32_1 = arith.constant 0 : i32
    return %c0_i32_0, %1 : i32, i32
  }
  func.func @transform_3(%arg0: i32) -> (i32, i32) {
    %c0_i32 = arith.constant 0 : i32
    %c0_i32_0 = arith.constant 0 : i32
    return %c0_i32, %arg0 : i32, i32
  }
}

</mosaic_0001>

<llo_original>
// kernel: moco_forward.3
$region0: #{moco_forward.3}
  #allocation0 [shape = 'u32[]', space=smem, size = 0x4, offset = 0x4, fixed_abs, tag = 'smem constant byte address 0x4 - core index']
  #allocation1 [shape = 'u32[144,128]{1,0:T(1,128)}', space=vmem, size = 0x12000, scoped, tag = 'internal scratch']
  %s0 = inlined_call_operand.vmem [shape: f32[2,128], index: 0, kind: input, shape index: {}]
  %s1 = inlined_call_operand.vmem [shape: bf16[2,32], index: 1, kind: input, shape index: {}]
  %s2 = inlined_call_operand.vmem [shape: bf16[32,256], index: 2, kind: input, shape index: {}]
  %s3 = inlined_call_operand.vmem [shape: f32[2,384], index: 3, kind: output, shape index: {}]
  %s4 = sld [smem:[#allocation0]]
  $region94: #{moco_forward.3} parent=0
    _
  %s6 = ssub.s32 1, %s4
  %s7 = scalar_select 0, %s6, %s4
  $region1: #{moco_forward.3} parent=0
    #allocation2 [shape = 'u8[16384]{0}', space=vmem, size = 0x4000, scoped, tag = 'input window, operand 2']
    loop: start=0, step=1, limit=5
    $region2: #{moco_forward.3} parent=1 // loop_pre_header
      _
    $region3: #{moco_forward.3} parent=1 // loop_header
      %s9 = sphi 0, %s13
      %p10 = scmp.ge.s32.totalorder %s9, 5
      %s17 = sphi 0, %s17
      %s19 = sphi 0, %s17
      %s20 = sphi 0, %s19
      %s34 = sphi 0, %s20
      %s38 = sphi 0, %s38
      %s40 = sphi 0, %s38
      %s41 = sphi 0, %s40
      %s55 = sphi 0, %s41
      %s67 = sphi 0, %s69
      %s70 = sphi 0, %s67
      %s71 = sphi 0, %s70
      %s87 = sphi 0, %s71
      %s93 = sphi 0, %s95
      %s96 = sphi 0, %s93
      %s97 = sphi 0, %s96
      %s113 = sphi 0, %s97
    $region4: #{moco_forward.3} parent=1 // loop_header_branch
      %12 = sbr.rel (%p10) target = $region8
    $region5: #{moco_forward.3} parent=1 // loop_body
      %s14 = ssub.s32 %s9, 1
      %s15 = ssub.s32 %s9, 2
      %s16 = sadd.s32 %s9, 1
      %s18 = sadd.s32 %s17, 1
      %p21 = scmp.eq.s32.totalorder %s9, 2
      %p22 = scmp.ne.s32.totalorder %s17, %s19
      %p23 = scmp.eq.s32.totalorder %s9, 0
      %p24 = por %p22, %p23
      %p25 = scmp.ne.s32.totalorder %s17, %s19
      %p26 = scmp.eq.s32.totalorder %s14, 2
      %p27 = por %p25, %p26
      %p28 = scmp.ne.s32.totalorder %s19, %s20
      %p29 = scmp.eq.s32.totalorder %s14, 0
      %p30 = por %p28, %p29
      %p31 = scmp.ne.s32.totalorder %s19, %s20
      %p32 = scmp.eq.s32.totalorder %s15, 2
      %p33 = por %p31, %p32
      %p35 = scmp.ne.s32.totalorder %s20, %s34
      %p36 = scmp.eq.s32.totalorder %s15, 0
      %p37 = por %p35, %p36
      %s39 = sadd.s32 %s38, 1
      %p42 = scmp.eq.s32.totalorder %s9, 2
      %p43 = scmp.ne.s32.totalorder %s38, %s40
      %p44 = scmp.eq.s32.totalorder %s9, 0
      %p45 = por %p43, %p44
      %p46 = scmp.ne.s32.totalorder %s38, %s40
      %p47 = scmp.eq.s32.totalorder %s14, 2
      %p48 = por %p46, %p47
      %p49 = scmp.ne.s32.totalorder %s40, %s41
      %p50 = scmp.eq.s32.totalorder %s14, 0
      %p51 = por %p49, %p50
      %p52 = scmp.ne.s32.totalorder %s40, %s41
      %p53 = scmp.eq.s32.totalorder %s15, 2
      %p54 = por %p52, %p53
      %p56 = scmp.ne.s32.totalorder %s41, %s55
      %p57 = scmp.eq.s32.totalorder %s15, 0
      %p58 = por %p56, %p57
      %s59 = ssub.s32 %s9, 1
      %p60 = scmp.gt.s32.totalorder %s59, 0
      %s61 = scalar_select %p60, %s59, 0
      %s62 = ssub.s32 %s16, 1
      %p63 = scmp.gt.s32.totalorder %s62, 0
      %s64 = scalar_select %p63, %s62, 0
      %s65 = ssub.s32 %s61, %s64
      %p66 = scmp.eq.s32.totalorder %s65, 0
      %s68 = sadd.s32 %s67, 1
      %s69 = scalar_select %p66, %s67, %s68
      %p72 = pneg %p66
      %p73 = scmp.eq.s32.totalorder %s9, 2
      %p74 = por %p72, %p73
      %p75 = scmp.ne.s32.totalorder %s67, %s70
      %p76 = scmp.eq.s32.totalorder %s9, 0
      %p77 = por %p75, %p76
      %p78 = scmp.ne.s32.totalorder %s67, %s70
      %p79 = scmp.eq.s32.totalorder %s14, 2
      %p80 = por %p78, %p79
      %p81 = scmp.ne.s32.totalorder %s70, %s71
      %p82 = scmp.eq.s32.totalorder %s14, 0
      %p83 = por %p81, %p82
      %p84 = scmp.ne.s32.totalorder %s70, %s71
      %p85 = scmp.eq.s32.totalorder %s15, 2
      %p86 = por %p84, %p85
      %p88 = scmp.ne.s32.totalorder %s71, %s87
      %p89 = scmp.eq.s32.totalorder %s15, 0
      %p90 = por %p88, %p89
      %s91 = ssub.s32 %s9, %s16
      %p92 = scmp.eq.s32.totalorder %s91, 0
      %s94 = sadd.s32 %s93, 1
      %s95 = scalar_select %p92, %s93, %s94
      %p98 = pneg %p92
      %p99 = scmp.eq.s32.totalorder %s9, 2
      %p100 = por %p98, %p99
      %p101 = scmp.ne.s32.totalorder %s93, %s96
      %p102 = scmp.eq.s32.totalorder %s9, 0
      %p103 = por %p101, %p102
      %p104 = scmp.ne.s32.totalorder %s93, %s96
      %p105 = scmp.eq.s32.totalorder %s14, 2
      %p106 = por %p104, %p105
      %p107 = scmp.ne.s32.totalorder %s96, %s97
      %p108 = scmp.eq.s32.totalorder %s14, 0
      %p109 = por %p107, %p108
      %p110 = scmp.ne.s32.totalorder %s96, %s97
      %p111 = scmp.eq.s32.totalorder %s15, 2
      %p112 = por %p110, %p111
      %p114 = scmp.ne.s32.totalorder %s97, %s113
      %p115 = scmp.eq.s32.totalorder %s15, 0
      %p116 = por %p114, %p115
      %p117 = scmp.le.s32.totalorder 1, %s9
      %p118 = scmp.lt.s32.totalorder %s9, 4
      %p119 = pnand %p117, %p118
      %p120 = pneg %p119
      // Predicated region
      $region9: #{moco_forward.3} parent=5 // pred_check
        _
      $region10: #{moco_forward.3} parent=5 // pred_check_branch
        %122 = sbr.rel (%p119) target = $region12
      $region11: #{moco_forward.3} parent=5 // pred_region
        %s123 = ssub.s32 %s9, 1
        // Predicated region
        $region13: #{moco_forward.3} parent=11 // pred_check
          %p124 = pneg %p30
        $region14: #{moco_forward.3} parent=11 // pred_check_branch
          %126 = sbr.rel (%p124) target = $region16
        $region15: #{moco_forward.3} parent=11 // pred_region
          _
        $region16: #{moco_forward.3} parent=11 // pred_fallthru
          _
        // Predicated region
        $region17: #{moco_forward.3} parent=11 // pred_check
          %p127 = pneg %p51
        $region18: #{moco_forward.3} parent=11 // pred_check_branch
          %129 = sbr.rel (%p127) target = $region20
        $region19: #{moco_forward.3} parent=11 // pred_region
          _
        $region20: #{moco_forward.3} parent=11 // pred_fallthru
          _
      $region12: #{moco_forward.3} parent=5 // pred_fallthru
        _
      %p130 = scmp.lt.s32.totalorder %s9, 3
      // Predicated region
      $region21: #{moco_forward.3} parent=5 // pred_check
        %p131 = pneg %p130
      $region22: #{moco_forward.3} parent=5 // pred_check_branch
        %133 = sbr.rel (%p131) target = $region24
      $region23: #{moco_forward.3} parent=5 // pred_region
        // Predicated region
        $region25: #{moco_forward.3} parent=23 // pred_check
          %p134 = pneg %p77
        $region26: #{moco_forward.3} parent=23 // pred_check_branch
          %136 = sbr.rel (%p134) target = $region28
        $region27: #{moco_forward.3} parent=23 // pred_region
          %s137 = sand.u32 %s67, 1
          %s138 = sand.u32 %s67, 1
          %s139 = smul.addr %s138, 16
          %s140 = scalar_lea.vmem [#allocation2], %s139
          %s141 = ssub.s32 %s9, 1
          %p142 = scmp.gt.s32.totalorder %s141, 0
          %s143 = scalar_select %p142, %s141, 0
          %s144 = smul.addr %s143, 4
          %s145 = scalar_lea.vmem %s2, %s144
          // Predicated region
          $region29: #{moco_forward.3} parent=27 // pred_check
            _
          $region30: #{moco_forward.3} parent=27 // pred_check_branch
            %147 = sbr.rel (0) target = $region32
          $region31: #{moco_forward.3} parent=27 // pred_region
            // Predicated region
            $region33: #{moco_forward.3} parent=31 // pred_check
              _
            $region34: #{moco_forward.3} parent=31 // pred_check_branch
              %149 = sbr.rel target = $region36
            $region35: #{moco_forward.3} parent=31 // pred_region
              // Predicated region
              $region48: #{moco_forward.3} parent=35 // pred_check
                _
              $region49: #{moco_forward.3} parent=35 // pred_check_branch
                %170 = sbr.rel (0) target = $region51
              $region50: #{moco_forward.3} parent=35 // pred_region
                loop: start=0, step=1, limit=1
                $region52: #{moco_forward.3} parent=50 // loop_pre_header
                  _
                $region53: #{moco_forward.3} parent=50 // loop_header
                  %s172 = sphi 0, %s176
                  %p173 = scmp.ge.s32.totalorder %s172, 1
                  %s177 = sphi %s145, %s145
                  %s178 = sphi %s140, %s140
                $region54: #{moco_forward.3} parent=50 // loop_header_branch
                  %175 = sbr.rel (%p173) target = $region58
                $region55: #{moco_forward.3} parent=50 // loop_body
                  _
                $region56: #{moco_forward.3} parent=50 // loop_footer
                  %s176 = sadd.s32 1, %s172
                $region57: #{moco_forward.3} parent=50 // loop_footer_branch
                  %171 = sbr.rel target = $region53
                $region58: #{moco_forward.3} parent=50 // loop_exit
                  _
                loop: start=0, step=1, limit=1
                $region59: #{moco_forward.3} parent=50 // loop_pre_header
                  _
                $region60: #{moco_forward.3} parent=50 // loop_header
                  %s181 = sphi 0, %s185
                  %p182 = scmp.ge.s32.totalorder %s181, 1
                  %s186 = sphi %s145, %s145
                  %s187 = sphi %s140, %s140
                $region61: #{moco_forward.3} parent=50 // loop_header_branch
                  %184 = sbr.rel (%p182) target = $region65
                $region62: #{moco_forward.3} parent=50 // loop_body
                  %v188 = vld [vmem:[%s186] sm:$0xf]
                  %189 = vst [vmem:[%s187] sm:$0xf] %v188
                  %v190 = vld [vmem:[%s186 + $0x8] sm:$0xf]
                  %191 = vst [vmem:[%s187 + $0x4] sm:$0xf] %v190
                  %v192 = vld [vmem:[%s186 + $0x10] sm:$0xf]
                  %193 = vst [vmem:[%s187 + $0x8] sm:$0xf] %v192
                  %v194 = vld [vmem:[%s186 + $0x18] sm:$0xf]
                  %195 = vst [vmem:[%s187 + $0xc] sm:$0xf] %v194
                $region63: #{moco_forward.3} parent=50 // loop_footer
                  %s185 = sadd.s32 1, %s181
                $region64: #{moco_forward.3} parent=50 // loop_footer_branch
                  %180 = sbr.rel target = $region60
                $region65: #{moco_forward.3} parent=50 // loop_exit
                  _
              $region51: #{moco_forward.3} parent=35 // pred_fallthru
                _
            $region36: #{moco_forward.3} parent=31 // pred_fallthru
              _
            // Predicated region
            $region37: #{moco_forward.3} parent=31 // pred_check
              _
            $region38: #{moco_forward.3} parent=31 // pred_check_branch
              %151 = sbr.rel (0) target = $region40
            $region39: #{moco_forward.3} parent=31 // pred_region
              loop: start=0, step=1, limit=1
              $region41: #{moco_forward.3} parent=39 // loop_pre_header
                _
              $region42: #{moco_forward.3} parent=39 // loop_header
                %s154 = sphi 0, %s158
                %p155 = scmp.ge.s32.totalorder %s154, 1
                %s159 = sphi %s145, %s145
                %s160 = sphi %s140, %s140
              $region43: #{moco_forward.3} parent=39 // loop_header_branch
                %157 = sbr.rel (%p155) target = $region47
              $region44: #{moco_forward.3} parent=39 // loop_body
                %v161 = vld [vmem:[%s159] sm:$0xf]
                %162 = vst [vmem:[%s160] sm:$0xf] %v161
                %v163 = vld [vmem:[%s159 + $0x8] sm:$0xf]
                %164 = vst [vmem:[%s160 + $0x4] sm:$0xf] %v163
                %v165 = vld [vmem:[%s159 + $0x10] sm:$0xf]
                %166 = vst [vmem:[%s160 + $0x8] sm:$0xf] %v165
                %v167 = vld [vmem:[%s159 + $0x18] sm:$0xf]
                %168 = vst [vmem:[%s160 + $0xc] sm:$0xf] %v167
              $region45: #{moco_forward.3} parent=39 // loop_footer
                %s158 = sadd.s32 1, %s154
              $region46: #{moco_forward.3} parent=39 // loop_footer_branch
                %153 = sbr.rel target = $region42
              $region47: #{moco_forward.3} parent=39 // loop_exit
                _
            $region40: #{moco_forward.3} parent=31 // pred_fallthru
              _
          $region32: #{moco_forward.3} parent=27 // pred_fallthru
            _
          %196 = vnop
        $region28: #{moco_forward.3} parent=23 // pred_fallthru
          _
      $region24: #{moco_forward.3} parent=5 // pred_fallthru
        _
      %p197 = scmp.le.s32.totalorder 1, %s9
      %p198 = scmp.lt.s32.totalorder %s9, 4
      %p199 = pnand %p197, %p198
      %p200 = pneg %p199
      // Predicated region
      $region66: #{moco_forward.3} parent=5 // pred_check
        _
      $region67: #{moco_forward.3} parent=5 // pred_check_branch
        %202 = sbr.rel (%p199) target = $region69
      $region68: #{moco_forward.3} parent=5 // pred_region
        %s203 = ssub.s32 %s9, 1
        %s204 = sand.u32 %s70, 1
        %s205 = sand.u32 %s70, 1
        %s206 = smul.addr %s205, 16
        %s207 = scalar_lea.vmem [#allocation2], %s206
        // Predicated region
        $region70: #{moco_forward.3} parent=68 // pred_check
          %p208 = pneg %p83
        $region71: #{moco_forward.3} parent=68 // pred_check_branch
          %210 = sbr.rel (%p208) target = $region73
        $region72: #{moco_forward.3} parent=68 // pred_region
          _
        $region73: #{moco_forward.3} parent=68 // pred_fallthru
          _
        %p211 = pneg %p30
        %p212 = pneg %p27
        %p213 = pneg %p51
        %p214 = pneg %p48
        %s215 = sand.u32 %s70, 1
        %s216 = sand.u32 %s70, 1
        %s217 = smul.addr %s216, 16
        %s218 = scalar_lea.vmem [#allocation2], %s217
        %p219 = pneg %p83
        %p220 = pneg %p80
        %p221 = pneg %p109
        %p222 = pneg %p106
        %p223 = scmp.lt.s32.totalorder %s14, 2
        %s224 = scalar_select %p223, %s14, 2
        %s225 = smul.addr %s224, 2
        %s226 = scalar_lea.vmem %s3, %s225
        %s227 = ssub.s32 %s14, 1
        %p228 = scmp.gt.s32.totalorder %s227, 0
        %s229 = scalar_select %p228, %s227, 0
        %p230 = scmp.lt.s32.totalorder %s14, 2
        %s231 = scalar_select %p230, %s14, 2
        %s232 = smul.addr %s231, 2
        %s233 = scalar_lea.vmem %s3, %s232
        %p235 = scmp.eq.s32.totalorder %s14, 0
        // Predicated region
        $region74: #{moco_forward.3} parent=68 // pred_check
          %p236 = pneg %p235
        $region75: #{moco_forward.3} parent=68 // pred_check_branch
          %238 = sbr.rel (%p236) target = $region77
        $region76: #{moco_forward.3} parent=68 // pred_region
          %v239 = vld [vmem:[%s0] sm:$0x3]
          %240 = vst [vmem:[%s233] sm:$0x3] %v239
        $region77: #{moco_forward.3} parent=68 // pred_fallthru
          _
        %p241 = scmp.gt.s32.totalorder %s14, 0
        // Predicated region
        $region78: #{moco_forward.3} parent=68 // pred_check
          %p242 = pneg %p241
        $region79: #{moco_forward.3} parent=68 // pred_check_branch
          %244 = sbr.rel (%p242) target = $region81
        $region80: #{moco_forward.3} parent=68 // pred_region
          %v245 = vld [vmem:[%s1] sm:$0x1]
          %v246 = vld [vmem:[%s207] sm:$0xf]
          %v247 = vld [vmem:[%s207 + $0x4] sm:$0xf]
          %v248 = vld [vmem:[%s207 + $0x8] sm:$0xf]
          %v249 = vld [vmem:[%s207 + $0xc] sm:$0xf]
          %v254 = vunpack.c.l.b16 %v246
          %v255 = vunpack.c.l.b16 %v247
          %v256 = vunpack.c.l.b16 %v248
          %v257 = vunpack.c.l.b16 %v249
          %v258 = vpack.c.b16 %v255, %v254
          %v259 = vpack.c.b16 %v257, %v256
          %vm262 = vcmask 261120
          %v264 = vsel %vm262, %v245, 0
          %266 = vmatprep.subr.bf16.mxu0 0
          %267 = vmatpush1.bf16.msra.mxu0 %v258
          %268 = vmatprep.subr.bf16.mxu0 0
          %269 = vmatpush1.bf16.msra.mxu0 %v259
          %270 = vmatprep.subr.bf16.mxu0 0
          %271 = vmatpush1.bf16.msra.mxu0 0
          %272 = vmatprep.subr.bf16.mxu0 0
          %273 = vmatpush1.bf16.msra.mxu0 0
          %274 = vmatprep.subr.bf16.mxu0 0
          %275 = vmatpush1.bf16.msra.mxu0 0
          %276 = vmatprep.subr.bf16.mxu0 0
          %277 = vmatpush1.bf16.msra.mxu0 0
          %278 = vmatprep.subr.bf16.mxu0 0
          %279 = vmatpush1.bf16.msra.mxu0 0
          %280 = vmatprep.subr.bf16.mxu0 0
          %281 = vmatpush1.bf16.msra.mxu0 0
          %282 = vmatprep.subr.bf16.mxu0 0
          %283 = vmatpush1.bf16.msra.mxu0 0
          %284 = vmatprep.subr.bf16.mxu0 0
          %285 = vmatpush1.bf16.msra.mxu0 0
          %286 = vmatprep.subr.bf16.mxu0 0
          %287 = vmatpush1.bf16.msra.mxu0 0
          %288 = vmatprep.subr.bf16.mxu0 0
          %289 = vmatpush1.bf16.msra.mxu0 0
          %290 = vmatprep.subr.bf16.mxu0 0
          %291 = vmatpush1.bf16.msra.mxu0 0
          %292 = vmatprep.subr.bf16.mxu0 0
          %293 = vmatpush1.bf16.msra.mxu0 0
          %294 = vmatprep.subr.bf16.mxu0 0
          %295 = vmatpush1.bf16.msra.mxu0 0
          %296 = vmatprep.subr.bf16.mxu0 0
          %297 = vmatpush1.bf16.msra.mxu0 0
          %298 = vmatprep.mubr.bf16.mxu0 0
          %299 = vmatmul.mubr.bf16.gmra.mrb[0].mxu0 %v264
          %v300 = vpop.f32.mrb[0].mxu0
          %v301 = vadd.f32 0.0, %v300
          %v302 = vpop.f32.mrb[0].mxu0
          %v303 = vpop.f32.mrb[0].mxu0
          %v304 = vpop.f32.mrb[0].mxu0
          %305 = vdwg.mxu0
          %306 = vst [vmem:[%s233] sm:$0x3] %v301
        $region81: #{moco_forward.3} parent=68 // pred_fallthru
          _
        %p307 = scmp.lt.s32.totalorder %s14, 2
        %s308 = scalar_select %p307, %s14, 2
        %s309 = smul.addr %s308, 2
        %s310 = scalar_lea.vmem %s3, %s309
        // Predicated region
        $region82: #{moco_forward.3} parent=68 // pred_check
          %p311 = pneg %p106
        $region83: #{moco_forward.3} parent=68 // pred_check_branch
          %313 = sbr.rel (%p311) target = $region85
        $region84: #{moco_forward.3} parent=68 // pred_region
          _
        $region85: #{moco_forward.3} parent=68 // pred_fallthru
          _
      $region69: #{moco_forward.3} parent=5 // pred_fallthru
        _
      %p314 = scmp.le.s32.totalorder 2, %s9
      // Predicated region
      $region86: #{moco_forward.3} parent=5 // pred_check
        %p315 = pneg %p314
      $region87: #{moco_forward.3} parent=5 // pred_check_branch
        %317 = sbr.rel (%p315) target = $region89
      $region88: #{moco_forward.3} parent=5 // pred_region
        %s318 = ssub.s32 %s9, 2
        // Predicated region
        $region90: #{moco_forward.3} parent=88 // pred_check
          %p319 = pneg %p112
        $region91: #{moco_forward.3} parent=88 // pred_check_branch
          %321 = sbr.rel (%p319) target = $region93
        $region92: #{moco_forward.3} parent=88 // pred_region
          %p322 = scmp.lt.s32.totalorder %s15, 2
          %s323 = scalar_select %p322, %s15, 2
          %s324 = smul.addr %s323, 2
          %s325 = scalar_lea.vmem %s3, %s324
        $region93: #{moco_forward.3} parent=88 // pred_fallthru
          _
      $region89: #{moco_forward.3} parent=5 // pred_fallthru
        _
    $region6: #{moco_forward.3} parent=1 // loop_footer
      %s13 = sadd.s32 1, %s9
    $region7: #{moco_forward.3} parent=1 // loop_footer_branch
      %8 = sbr.rel target = $region3
    $region8: #{moco_forward.3} parent=1 // loop_exit
      _

// kernel: moco_forward.2
$region0: #{moco_forward.2}
  #allocation0 [shape = 'u32[]', space=smem, size = 0x4, offset = 0x4, fixed_abs, tag = 'smem constant byte address 0x4 - core index']
  #allocation1 [shape = 'u32[144,128]{1,0:T(1,128)}', space=vmem, size = 0x12000, scoped, tag = 'internal scratch']
  %s0 = inlined_call_operand.vmem [shape: bf16[512,36], index: 0, kind: input, shape index: {}]
  %s1 = inlined_call_operand.vmem [shape: bf16[512,36], index: 1, kind: input, shape index: {}]
  %s2 = inlined_call_operand.vmem [shape: f32[36,8], index: 2, kind: input, shape index: {}]
  %s3 = inlined_call_operand.vmem [shape: f32[1,8], index: 3, kind: input, shape index: {}]
  %s4 = inlined_call_operand.vmem [shape: f32[8,32], index: 4, kind: input, shape index: {}]
  %s5 = inlined_call_operand.vmem [shape: f32[1,32], index: 5, kind: input, shape index: {}]
  %s6 = inlined_call_operand.vmem [shape: f32[36,8], index: 6, kind: input, shape index: {}]
  %s7 = inlined_call_operand.vmem [shape: f32[1,8], index: 7, kind: input, shape index: {}]
  %s8 = inlined_call_operand.vmem [shape: f32[8,32], index: 8, kind: input, shape index: {}]
  %s9 = inlined_call_operand.vmem [shape: f32[1,32], index: 9, kind: input, shape index: {}]
  %s10 = inlined_call_operand.vmem [shape: f32[2,128], index: 10, kind: output, shape index: {0}]
  %s11 = inlined_call_operand.vmem [shape: bf16[2,32], index: 11, kind: output, shape index: {1}]
  %s12 = inlined_call_operand.vmem [shape: bf16[2,32], index: 12, kind: output, shape index: {2}]
  %13 = xla_tuple %s10, %s11, %s12
  %s14 = sld [smem:[#allocation0]]
  $region66: #{moco_forward.2} parent=0
    _
  %s16 = ssub.s32 1, %s14
  %s17 = scalar_select 0, %s16, %s14
  // Predicated region
  $region2: #{moco_forward.2} parent=0 // pred_check
    _
  $region3: #{moco_forward.2} parent=0 // pred_check_branch
    %19 = sbr.rel (0) target = $region5
  $region4: #{moco_forward.2} parent=0 // pred_region
    _
  $region5: #{moco_forward.2} parent=0 // pred_fallthru
    _
  // Predicated region
  $region6: #{moco_forward.2} parent=0 // pred_check
    _
  $region7: #{moco_forward.2} parent=0 // pred_check_branch
    %21 = sbr.rel (0) target = $region9
  $region8: #{moco_forward.2} parent=0 // pred_region
    _
  $region9: #{moco_forward.2} parent=0 // pred_fallthru
    _
  // Predicated region
  $region10: #{moco_forward.2} parent=0 // pred_check
    _
  $region11: #{moco_forward.2} parent=0 // pred_check_branch
    %23 = sbr.rel (0) target = $region13
  $region12: #{moco_forward.2} parent=0 // pred_region
    _
  $region13: #{moco_forward.2} parent=0 // pred_fallthru
    _
  // Predicated region
  $region14: #{moco_forward.2} parent=0 // pred_check
    _
  $region15: #{moco_forward.2} parent=0 // pred_check_branch
    %25 = sbr.rel (0) target = $region17
  $region16: #{moco_forward.2} parent=0 // pred_region
    _
  $region17: #{moco_forward.2} parent=0 // pred_fallthru
    _
  // Predicated region
  $region18: #{moco_forward.2} parent=0 // pred_check
    _
  $region19: #{moco_forward.2} parent=0 // pred_check_branch
    %27 = sbr.rel (0) target = $region21
  $region20: #{moco_forward.2} parent=0 // pred_region
    _
  $region21: #{moco_forward.2} parent=0 // pred_fallthru
    _
  // Predicated region
  $region22: #{moco_forward.2} parent=0 // pred_check
    _
  $region23: #{moco_forward.2} parent=0 // pred_check_branch
    %29 = sbr.rel (0) target = $region25
  $region24: #{moco_forward.2} parent=0 // pred_region
    _
  $region25: #{moco_forward.2} parent=0 // pred_fallthru
    _
  // Predicated region
  $region26: #{moco_forward.2} parent=0 // pred_check
    _
  $region27: #{moco_forward.2} parent=0 // pred_check_branch
    %31 = sbr.rel (0) target = $region29
  $region28: #{moco_forward.2} parent=0 // pred_region
    _
  $region29: #{moco_forward.2} parent=0 // pred_fallthru
    _
  // Predicated region
  $region30: #{moco_forward.2} parent=0 // pred_check
    _
  $region31: #{moco_forward.2} parent=0 // pred_check_branch
    %33 = sbr.rel (0) target = $region33
  $region32: #{moco_forward.2} parent=0 // pred_region
    _
  $region33: #{moco_forward.2} parent=0 // pred_fallthru
    _
  // Predicated region
  $region34: #{moco_forward.2} parent=0 // pred_check
    _
  $region35: #{moco_forward.2} parent=0 // pred_check_branch
    %35 = sbr.rel (0) target = $region37
  $region36: #{moco_forward.2} parent=0 // pred_region
    _
  $region37: #{moco_forward.2} parent=0 // pred_fallthru
    _
  // Predicated region
  $region38: #{moco_forward.2} parent=0 // pred_check
    _
  $region39: #{moco_forward.2} parent=0 // pred_check_branch
    %37 = sbr.rel (0) target = $region41
  $region40: #{moco_forward.2} parent=0 // pred_region
    _
  $region41: #{moco_forward.2} parent=0 // pred_fallthru
    _
  %v39 = vld [vmem:[%s0] sm:$0xf]
  %v40 = vld [vmem:[%s0 + $0x4] sm:$0xf]
  %v41 = vld [vmem:[%s0 + $0x8] sm:$0xf]
  %v42 = vld [vmem:[%s0 + $0xc] sm:$0xf]
  %v43 = vld [vmem:[%s0 + $0x10] sm:$0xf]
  %v44 = vld [vmem:[%s0 + $0x14] sm:$0xf]
  %v45 = vld [vmem:[%s0 + $0x18] sm:$0xf]
  %v46 = vld [vmem:[%s0 + $0x1c] sm:$0xf]
  %v47 = vld [vmem:[%s0 + $0x20] sm:$0xf]
  %v48 = vld [vmem:[%s0 + $0x24] sm:$0xf]
  %v49 = vld [vmem:[%s0 + $0x28] sm:$0xf]
  %v50 = vld [vmem:[%s0 + $0x2c] sm:$0xf]
  %v51 = vld [vmem:[%s0 + $0x30] sm:$0xf]
  %v52 = vld [vmem:[%s0 + $0x34] sm:$0xf]
  %v53 = vld [vmem:[%s0 + $0x38] sm:$0xf]
  %v54 = vld [vmem:[%s0 + $0x3c] sm:$0xf]
  %v55 = vld [vmem:[%s0 + $0x40] sm:$0xf]
  %v56 = vld [vmem:[%s0 + $0x44] sm:$0xf]
  %v57 = vld [vmem:[%s0 + $0x48] sm:$0xf]
  %v58 = vld [vmem:[%s0 + $0x4c] sm:$0xf]
  %v59 = vld [vmem:[%s0 + $0x50] sm:$0xf]
  %v60 = vld [vmem:[%s0 + $0x54] sm:$0xf]
  %v61 = vld [vmem:[%s0 + $0x58] sm:$0xf]
  %v62 = vld [vmem:[%s0 + $0x5c] sm:$0xf]
  %v63 = vld [vmem:[%s0 + $0x60] sm:$0xf]
  %v64 = vld [vmem:[%s0 + $0x64] sm:$0xf]
  %v65 = vld [vmem:[%s0 + $0x68] sm:$0xf]
  %v66 = vld [vmem:[%s0 + $0x6c] sm:$0xf]
  %v67 = vld [vmem:[%s0 + $0x70] sm:$0xf]
  %v68 = vld [vmem:[%s0 + $0x74] sm:$0xf]
  %v69 = vld [vmem:[%s0 + $0x78] sm:$0xf]
  %v70 = vld [vmem:[%s0 + $0x7c] sm:$0xf]
  %v71 = vld [vmem:[%s0 + $0x80] sm:$0xf]
  %v72 = vld [vmem:[%s0 + $0x84] sm:$0xf]
  %v73 = vld [vmem:[%s0 + $0x88] sm:$0xf]
  %v74 = vld [vmem:[%s0 + $0x8c] sm:$0xf]
  %v75 = vld [vmem:[%s0 + $0x90] sm:$0xf]
  %v76 = vld [vmem:[%s0 + $0x94] sm:$0xf]
  %v77 = vld [vmem:[%s0 + $0x98] sm:$0xf]
  %v78 = vld [vmem:[%s0 + $0x9c] sm:$0xf]
  %v79 = vld [vmem:[%s0 + $0xa0] sm:$0xf]
  %v80 = vld [vmem:[%s0 + $0xa4] sm:$0xf]
  %v81 = vld [vmem:[%s0 + $0xa8] sm:$0xf]
  %v82 = vld [vmem:[%s0 + $0xac] sm:$0xf]
  %v83 = vld [vmem:[%s0 + $0xb0] sm:$0xf]
  %v84 = vld [vmem:[%s0 + $0xb4] sm:$0xf]
  %v85 = vld [vmem:[%s0 + $0xb8] sm:$0xf]
  %v86 = vld [vmem:[%s0 + $0xbc] sm:$0xf]
  %v87 = vld [vmem:[%s0 + $0xc0] sm:$0xf]
  %v88 = vld [vmem:[%s0 + $0xc4] sm:$0xf]
  %v89 = vld [vmem:[%s0 + $0xc8] sm:$0xf]
  %v90 = vld [vmem:[%s0 + $0xcc] sm:$0xf]
  %v91 = vld [vmem:[%s0 + $0xd0] sm:$0xf]
  %v92 = vld [vmem:[%s0 + $0xd4] sm:$0xf]
  %v93 = vld [vmem:[%s0 + $0xd8] sm:$0xf]
  %v94 = vld [vmem:[%s0 + $0xdc] sm:$0xf]
  %v95 = vld [vmem:[%s0 + $0xe0] sm:$0xf]
  %v96 = vld [vmem:[%s0 + $0xe4] sm:$0xf]
  %v97 = vld [vmem:[%s0 + $0xe8] sm:$0xf]
  %v98 = vld [vmem:[%s0 + $0xec] sm:$0xf]
  %v99 = vld [vmem:[%s0 + $0xf0] sm:$0xf]
  %v100 = vld [vmem:[%s0 + $0xf4] sm:$0xf]
  %v101 = vld [vmem:[%s0 + $0xf8] sm:$0xf]
  %v102 = vld [vmem:[%s0 + $0xfc] sm:$0xf]
  %v103 = vld [vmem:[%s2] sm:$0xff]
  %v104 = vld [vmem:[%s2 + $0x8] sm:$0xff]
  %v105 = vld [vmem:[%s2 + $0x10] sm:$0xff]
  %v106 = vld [vmem:[%s2 + $0x18] sm:$0xff]
  %v107 = vld [vmem:[%s2 + $0x20] sm:$0xf]
  %v108 = vpack.c.bf16 %v104, %v103
  %v109 = vpack.c.bf16 %v106, %v105
  %v110 = vpack.c.bf16 %v107, %v107
  %v111 = vld [vmem:[%s3] sm:$0x1]
  %v113 = vlaneseq
  %v114 = vshrl.u32 %v113, 7
  %v115 = vsub.s32 0, %v114
  %v116 = vrot.slane %v111, %v115
  %v182 = vunpack.c.l.b16 %v39
  %v183 = vunpack.c.l.b16 %v40
  %v184 = vunpack.c.l.b16 %v41
  %v185 = vunpack.c.l.b16 %v42
  %v186 = vunpack.c.l.b16 %v43
  %v187 = vunpack.c.l.b16 %v44
  %v188 = vunpack.c.l.b16 %v45
  %v189 = vunpack.c.l.b16 %v46
  %v190 = vunpack.c.l.b16 %v47
  %v191 = vunpack.c.l.b16 %v48
  %v192 = vunpack.c.l.b16 %v49
  %v193 = vunpack.c.l.b16 %v50
  %v194 = vunpack.c.l.b16 %v51
  %v195 = vunpack.c.l.b16 %v52
  %v196 = vunpack.c.l.b16 %v53
  %v197 = vunpack.c.l.b16 %v54
  %v198 = vunpack.c.l.b16 %v55
  %v199 = vunpack.c.l.b16 %v56
  %v200 = vunpack.c.l.b16 %v57
  %v201 = vunpack.c.l.b16 %v58
  %v202 = vunpack.c.l.b16 %v59
  %v203 = vunpack.c.l.b16 %v60
  %v204 = vunpack.c.l.b16 %v61
  %v205 = vunpack.c.l.b16 %v62
  %v206 = vunpack.c.l.b16 %v63
  %v207 = vunpack.c.l.b16 %v64
  %v208 = vunpack.c.l.b16 %v65
  %v209 = vunpack.c.l.b16 %v66
  %v210 = vunpack.c.l.b16 %v67
  %v211 = vunpack.c.l.b16 %v68
  %v212 = vunpack.c.l.b16 %v69
  %v213 = vunpack.c.l.b16 %v70
  %v214 = vunpack.c.l.b16 %v71
  %v215 = vunpack.c.l.b16 %v72
  %v216 = vunpack.c.l.b16 %v73
  %v217 = vunpack.c.l.b16 %v74
  %v218 = vunpack.c.l.b16 %v75
  %v219 = vunpack.c.l.b16 %v76
  %v220 = vunpack.c.l.b16 %v77
  %v221 = vunpack.c.l.b16 %v78
  %v222 = vunpack.c.l.b16 %v79
  %v223 = vunpack.c.l.b16 %v80
  %v224 = vunpack.c.l.b16 %v81
  %v225 = vunpack.c.l.b16 %v82
  %v226 = vunpack.c.l.b16 %v83
  %v227 = vunpack.c.l.b16 %v84
  %v228 = vunpack.c.l.b16 %v85
  %v229 = vunpack.c.l.b16 %v86
  %v230 = vunpack.c.l.b16 %v87
  %v231 = vunpack.c.l.b16 %v88
  %v232 = vunpack.c.l.b16 %v89
  %v233 = vunpack.c.l.b16 %v90
  %v234 = vunpack.c.l.b16 %v91
  %v235 = vunpack.c.l.b16 %v92
  %v236 = vunpack.c.l.b16 %v93
  %v237 = vunpack.c.l.b16 %v94
  %v238 = vunpack.c.l.b16 %v95
  %v239 = vunpack.c.l.b16 %v96
  %v240 = vunpack.c.l.b16 %v97
  %v241 = vunpack.c.l.b16 %v98
  %v242 = vunpack.c.l.b16 %v99
  %v243 = vunpack.c.l.b16 %v100
  %v244 = vunpack.c.l.b16 %v101
  %v245 = vunpack.c.l.b16 %v102
  %v246 = vpack.c.b16 %v183, %v182
  %v247 = vpack.c.b16 %v185, %v184
  %v248 = vpack.c.b16 %v187, %v186
  %v249 = vpack.c.b16 %v189, %v188
  %v250 = vpack.c.b16 %v191, %v190
  %v251 = vpack.c.b16 %v193, %v192
  %v252 = vpack.c.b16 %v195, %v194
  %v253 = vpack.c.b16 %v197, %v196
  %v254 = vpack.c.b16 %v199, %v198
  %v255 = vpack.c.b16 %v201, %v200
  %v256 = vpack.c.b16 %v203, %v202
  %v257 = vpack.c.b16 %v205, %v204
  %v258 = vpack.c.b16 %v207, %v206
  %v259 = vpack.c.b16 %v209, %v208
  %v260 = vpack.c.b16 %v211, %v210
  %v261 = vpack.c.b16 %v213, %v212
  %v262 = vpack.c.b16 %v215, %v214
  %v263 = vpack.c.b16 %v217, %v216
  %v264 = vpack.c.b16 %v219, %v218
  %v265 = vpack.c.b16 %v221, %v220
  %v266 = vpack.c.b16 %v223, %v222
  %v267 = vpack.c.b16 %v225, %v224
  %v268 = vpack.c.b16 %v227, %v226
  %v269 = vpack.c.b16 %v229, %v228
  %v270 = vpack.c.b16 %v231, %v230
  %v271 = vpack.c.b16 %v233, %v232
  %v272 = vpack.c.b16 %v235, %v234
  %v273 = vpack.c.b16 %v237, %v236
  %v274 = vpack.c.b16 %v239, %v238
  %v275 = vpack.c.b16 %v241, %v240
  %v276 = vpack.c.b16 %v243, %v242
  %v277 = vpack.c.b16 %v245, %v244
  %vm278 = vcmask 293888
  %v280 = vsel %vm278, %v246, 0
  %v283 = vsel %vm278, %v247, 0
  %v286 = vsel %vm278, %v248, 0
  %v289 = vsel %vm278, %v249, 0
  %v292 = vsel %vm278, %v250, 0
  %v295 = vsel %vm278, %v251, 0
  %v298 = vsel %vm278, %v252, 0
  %v301 = vsel %vm278, %v253, 0
  %v304 = vsel %vm278, %v254, 0
  %v307 = vsel %vm278, %v255, 0
  %v310 = vsel %vm278, %v256, 0
  %v313 = vsel %vm278, %v257, 0
  %v316 = vsel %vm278, %v258, 0
  %v319 = vsel %vm278, %v259, 0
  %v322 = vsel %vm278, %v260, 0
  %v325 = vsel %vm278, %v261, 0
  %v328 = vsel %vm278, %v262, 0
  %v331 = vsel %vm278, %v263, 0
  %v334 = vsel %vm278, %v264, 0
  %v337 = vsel %vm278, %v265, 0
  %v340 = vsel %vm278, %v266, 0
  %v343 = vsel %vm278, %v267, 0
  %v346 = vsel %vm278, %v268, 0
  %v349 = vsel %vm278, %v269, 0
  %v352 = vsel %vm278, %v270, 0
  %v355 = vsel %vm278, %v271, 0
  %v358 = vsel %vm278, %v272, 0
  %v361 = vsel %vm278, %v273, 0
  %v364 = vsel %vm278, %v274, 0
  %v367 = vsel %vm278, %v275, 0
  %v370 = vsel %vm278, %v276, 0
  %v373 = vsel %vm278, %v277, 0
  %vm375 = vcmask 1041408
  %v377 = vsel %vm375, %v110, 0
  %379 = vmatprep.subr.bf16.mxu0 0
  %380 = vmatpush1.bf16.msra.mxu0 %v108
  %381 = vmatprep.subr.bf16.mxu0 0
  %382 = vmatpush1.bf16.msra.mxu0 %v109
  %383 = vmatprep.subr.bf16.mxu0 0
  %384 = vmatpush1.bf16.msra.mxu0 %v377
  %385 = vmatprep.subr.bf16.mxu0 0
  %386 = vmatpush1.bf16.msra.mxu0 0
  %387 = vmatprep.subr.bf16.mxu0 0
  %388 = vmatpush1.bf16.msra.mxu0 0
  %389 = vmatprep.subr.bf16.mxu0 0
  %390 = vmatpush1.bf16.msra.mxu0 0
  %391 = vmatprep.subr.bf16.mxu0 0
  %392 = vmatpush1.bf16.msra.mxu0 0
  %393 = vmatprep.subr.bf16.mxu0 0
  %394 = vmatpush1.bf16.msra.mxu0 0
  %395 = vmatprep.subr.bf16.mxu0 0
  %396 = vmatpush1.bf16.msra.mxu0 0
  %397 = vmatprep.subr.bf16.mxu0 0
  %398 = vmatpush1.bf16.msra.mxu0 0
  %399 = vmatprep.subr.bf16.mxu0 0
  %400 = vmatpush1.bf16.msra.mxu0 0
  %401 = vmatprep.subr.bf16.mxu0 0
  %402 = vmatpush1.bf16.msra.mxu0 0
  %403 = vmatprep.subr.bf16.mxu0 0
  %404 = vmatpush1.bf16.msra.mxu0 0
  %405 = vmatprep.subr.bf16.mxu0 0
  %406 = vmatpush1.bf16.msra.mxu0 0
  %407 = vmatprep.subr.bf16.mxu0 0
  %408 = vmatpush1.bf16.msra.mxu0 0
  %409 = vmatprep.subr.bf16.mxu0 0
  %410 = vmatpush1.bf16.msra.mxu0 0
  %411 = vmatprep.mubr.bf16.mxu0 0
  %412 = vmatmul.mubr.bf16.gmra.mrb[0].mxu0 %v280
  %v413 = vpop.f32.mrb[0].mxu0
  %v414 = vadd.f32 %v116, %v413
  %v415 = vpop.f32.mrb[0].mxu0
  %v416 = vpop.f32.mrb[0].mxu0
  %v417 = vadd.f32 %v116, %v416
  %v418 = vpop.f32.mrb[0].mxu0
  %419 = vmatprep.mubr.bf16.mxu0 0
  %420 = vmatmul.mubr.bf16.gmra.mrb[0].mxu0 %v283
  %v421 = vpop.f32.mrb[0].mxu0
  %v422 = vadd.f32 %v116, %v421
  %v423 = vpop.f32.mrb[0].mxu0
  %v424 = vpop.f32.mrb[0].mxu0
  %v425 = vadd.f32 %v116, %v424
  %v426 = vpop.f32.mrb[0].mxu0
  %427 = vmatprep.mubr.bf16.mxu0 0
  %428 = vmatmul.mubr.bf16.gmra.mrb[0].mxu0 %v286
  %v429 = vpop.f32.mrb[0].mxu0
  %v430 = vadd.f32 %v116, %v429
  %v431 = vpop.f32.mrb[0].mxu0
  %v432 = vpop.f32.mrb[0].mxu0
  %v433 = vadd.f32 %v116, %v432
  %v434 = vpop.f32.mrb[0].mxu0
  %435 = vmatprep.mubr.bf16.mxu0 0
  %436 = vmatmul.mubr.bf16.gmra.mrb[0].mxu0 %v289
  %v437 = vpop.f32.mrb[0].mxu0
  %v438 = vadd.f32 %v116, %v437
  %v439 = vpop.f32.mrb[0].mxu0
  %v440 = vpop.f32.mrb[0].mxu0
  %v441 = vadd.f32 %v116, %v440
  %v442 = vpop.f32.mrb[0].mxu0
  %443 = vmatprep.mubr.bf16.mxu0 0
  %444 = vmatmul.mubr.bf16.gmra.mrb[0].mxu0 %v292
  %v445 = vpop.f32.mrb[0].mxu0
  %v446 = vadd.f32 %v116, %v445
  %v447 = vpop.f32.mrb[0].mxu0
  %v448 = vpop.f32.mrb[0].mxu0
  %v449 = vadd.f32 %v116, %v448
  %v450 = vpop.f32.mrb[0].mxu0
  %451 = vmatprep.mubr.bf16.mxu0 0
  %452 = vmatmul.mubr.bf16.gmra.mrb[0].mxu0 %v295
  %v453 = vpop.f32.mrb[0].mxu0
  %v454 = vadd.f32 %v116, %v453
  %v455 = vpop.f32.mrb[0].mxu0
  %v456 = vpop.f32.mrb[0].mxu0
  %v457 = vadd.f32 %v116, %v456
  %v458 = vpop.f32.mrb[0].mxu0
  %459 = vmatprep.mubr.bf16.mxu0 0
  %460 = vmatmul.mubr.bf16.gmra.mrb[0].mxu0 %v298
  %v461 = vpop.f32.mrb[0].mxu0
  %v462 = vadd.f32 %v116, %v461
  %v463 = vpop.f32.mrb[0].mxu0
  %v464 = vpop.f32.mrb[0].mxu0
  %v465 = vadd.f32 %v116, %v464
  %v466 = vpop.f32.mrb[0].mxu0
  %467 = vmatprep.mubr.bf16.mxu0 0
  %468 = vmatmul.mubr.bf16.gmra.mrb[0].mxu0 %v301
  %v469 = vpop.f32.mrb[0].mxu0
  %v470 = vadd.f32 %v116, %v469
  %v471 = vpop.f32.mrb[0].mxu0
  %v472 = vpop.f32.mrb[0].mxu0
  %v473 = vadd.f32 %v116, %v472
  %v474 = vpop.f32.mrb[0].mxu0
  %475 = vmatprep.mubr.bf16.mxu0 0
  %476 = vmatmul.mubr.bf16.gmra.mrb[0].mxu0 %v304
  %v477 = vpop.f32.mrb[0].mxu0
  %v478 = vadd.f32 %v116, %v477
  %v479 = vpop.f32.mrb[0].mxu0
  %v480 = vpop.f32.mrb[0].mxu0
  %v481 = vadd.f32 %v116, %v480
  %v482 = vpop.f32.mrb[0].mxu0
  %483 = vmatprep.mubr.bf16.mxu0 0
  %484 = vmatmul.mubr.bf16.gmra.mrb[0].mxu0 %v307
  %v485 = vpop.f32.mrb[0].mxu0
  %v486 = vadd.f32 %v116, %v485
  %v487 = vpop.f32.mrb[0].mxu0
  %v488 = vpop.f32.mrb[0].mxu0
  %v489 = vadd.f32 %v116, %v488
  %v490 = vpop.f32.mrb[0].mxu0
  %491 = vmatprep.mubr.bf16.mxu0 0
  %492 = vmatmul.mubr.bf16.gmra.mrb[0].mxu0 %v310
  %v493 = vpop.f32.mrb[0].mxu0
  %v494 = vadd.f32 %v116, %v493
  %v495 = vpop.f32.mrb[0].mxu0
  %v496 = vpop.f32.mrb[0].mxu0
  %v497 = vadd.f32 %v116, %v496
  %v498 = vpop.f32.mrb[0].mxu0
  %499 = vmatprep.mubr.bf16.mxu0 0
  %500 = vmatmul.mubr.bf16.gmra.mrb[0].mxu0 %v313
  %v501 = vpop.f32.mrb[0].mxu0
  %v502 = vadd.f32 %v116, %v501
  %v503 = vpop.f32.mrb[0].mxu0
  %v504 = vpop.f32.mrb[0].mxu0
  %v505 = vadd.f32 %v116, %v504
  %v506 = vpop.f32.mrb[0].mxu0
  %507 = vmatprep.mubr.bf16.mxu0 0
  %508 = vmatmul.mubr.bf16.gmra.mrb[0].mxu0 %v316
  %v509 = vpop.f32.mrb[0].mxu0
  %v510 = vadd.f32 %v116, %v509
  %v511 = vpop.f32.mrb[0].mxu0
  %v512 = vpop.f32.mrb[0].mxu0
  %v513 = vadd.f32 %v116, %v512
  %v514 = vpop.f32.mrb[0].mxu0
  %515 = vmatprep.mubr.bf16.mxu0 0
  %516 = vmatmul.mubr.bf16.gmra.mrb[0].mxu0 %v319
  %v517 = vpop.f32.mrb[0].mxu0
  %v518 = vadd.f32 %v116, %v517
  %v519 = vpop.f32.mrb[0].mxu0
  %v520 = vpop.f32.mrb[0].mxu0
  %v521 = vadd.f32 %v116, %v520
  %v522 = vpop.f32.mrb[0].mxu0
  %523 = vmatprep.mubr.bf16.mxu0 0
  %524 = vmatmul.mubr.bf16.gmra.mrb[0].mxu0 %v322
  %v525 = vpop.f32.mrb[0].mxu0
  %v526 = vadd.f32 %v116, %v525
  %v527 = vpop.f32.mrb[0].mxu0
  %v528 = vpop.f32.mrb[0].mxu0
  %v529 = vadd.f32 %v116, %v528
  %v530 = vpop.f32.mrb[0].mxu0
  %531 = vmatprep.mubr.bf16.mxu0 0
  %532 = vmatmul.mubr.bf16.gmra.mrb[0].mxu0 %v325
  %v533 = vpop.f32.mrb[0].mxu0
  %v534 = vadd.f32 %v116, %v533
  %v535 = vpop.f32.mrb[0].mxu0
  %v536 = vpop.f32.mrb[0].mxu0
  %v537 = vadd.f32 %v116, %v536
  %v538 = vpop.f32.mrb[0].mxu0
  %539 = vmatprep.mubr.bf16.mxu0 0
  %540 = vmatmul.mubr.bf16.gmra.mrb[0].mxu0 %v328
  %v541 = vpop.f32.mrb[0].mxu0
  %v542 = vadd.f32 %v116, %v541
  %v543 = vpop.f32.mrb[0].mxu0
  %v544 = vpop.f32.mrb[0].mxu0
  %v545 = vadd.f32 %v116, %v544
  %v546 = vpop.f32.mrb[0].mxu0
  %547 = vmatprep.mubr.bf16.mxu0 0
  %548 = vmatmul.mubr.bf16.gmra.mrb[0].mxu0 %v331
  %v549 = vpop.f32.mrb[0].mxu0
  %v550 = vadd.f32 %v116, %v549
  %v551 = vpop.f32.mrb[0].mxu0
  %v552 = vpop.f32.mrb[0].mxu0
  %v553 = vadd.f32 %v116, %v552
  %v554 = vpop.f32.mrb[0].mxu0
  %555 = vmatprep.mubr.bf16.mxu0 0
  %556 = vmatmul.mubr.bf16.gmra.mrb[0].mxu0 %v334
  %v557 = vpop.f32.mrb[0].mxu0
  %v558 = vadd.f32 %v116, %v557
  %v559 = vpop.f32.mrb[0].mxu0
  %v560 = vpop.f32.mrb[0].mxu0
  %v561 = vadd.f32 %v116, %v560
  %v562 = vpop.f32.mrb[0].mxu0
  %563 = vmatprep.mubr.bf16.mxu0 0
  %564 = vmatmul.mubr.bf16.gmra.mrb[0].mxu0 %v337
  %v565 = vpop.f32.mrb[0].mxu0
  %v566 = vadd.f32 %v116, %v565
  %v567 = vpop.f32.mrb[0].mxu0
  %v568 = vpop.f32.mrb[0].mxu0
  %v569 = vadd.f32 %v116, %v568
  %v570 = vpop.f32.mrb[0].mxu0
  %571 = vmatprep.mubr.bf16.mxu0 0
  %572 = vmatmul.mubr.bf16.gmra.mrb[0].mxu0 %v340
  %v573 = vpop.f32.mrb[0].mxu0
  %v574 = vadd.f32 %v116, %v573
  %v575 = vpop.f32.mrb[0].mxu0
  %v576 = vpop.f32.mrb[0].mxu0
  %v577 = vadd.f32 %v116, %v576
  %v578 = vpop.f32.mrb[0].mxu0
  %579 = vmatprep.mubr.bf16.mxu0 0
  %580 = vmatmul.mubr.bf16.gmra.mrb[0].mxu0 %v343
  %v581 = vpop.f32.mrb[0].mxu0
  %v582 = vadd.f32 %v116, %v581
  %v583 = vpop.f32.mrb[0].mxu0
  %v584 = vpop.f32.mrb[0].mxu0
  %v585 = vadd.f32 %v116, %v584
  %v586 = vpop.f32.mrb[0].mxu0
  %587 = vmatprep.mubr.bf16.mxu0 0
  %588 = vmatmul.mubr.bf16.gmra.mrb[0].mxu0 %v346
  %v589 = vpop.f32.mrb[0].mxu0
  %v590 = vadd.f32 %v116, %v589
  %v591 = vpop.f32.mrb[0].mxu0
  %v592 = vpop.f32.mrb[0].mxu0
  %v593 = vadd.f32 %v116, %v592
  %v594 = vpop.f32.mrb[0].mxu0
  %595 = vmatprep.mubr.bf16.mxu0 0
  %596 = vmatmul.mubr.bf16.gmra.mrb[0].mxu0 %v349
  %v597 = vpop.f32.mrb[0].mxu0
  %v598 = vadd.f32 %v116, %v597
  %v599 = vpop.f32.mrb[0].mxu0
  %v600 = vpop.f32.mrb[0].mxu0
  %v601 = vadd.f32 %v116, %v600
  %v602 = vpop.f32.mrb[0].mxu0
  %603 = vmatprep.mubr.bf16.mxu0 0
  %604 = vmatmul.mubr.bf16.gmra.mrb[0].mxu0 %v352
  %v605 = vpop.f32.mrb[0].mxu0
  %v606 = vadd.f32 %v116, %v605
  %v607 = vpop.f32.mrb[0].mxu0
  %v608 = vpop.f32.mrb[0].mxu0
  %v609 = vadd.f32 %v116, %v608
  %v610 = vpop.f32.mrb[0].mxu0
  %611 = vmatprep.mubr.bf16.mxu0 0
  %612 = vmatmul.mubr.bf16.gmra.mrb[0].mxu0 %v355
  %v613 = vpop.f32.mrb[0].mxu0
  %v614 = vadd.f32 %v116, %v613
  %v615 = vpop.f32.mrb[0].mxu0
  %v616 = vpop.f32.mrb[0].mxu0
  %v617 = vadd.f32 %v116, %v616
  %v618 = vpop.f32.mrb[0].mxu0
  %619 = vmatprep.mubr.bf16.mxu0 0
  %620 = vmatmul.mubr.bf16.gmra.mrb[0].mxu0 %v358
  %v621 = vpop.f32.mrb[0].mxu0
  %v622 = vadd.f32 %v116, %v621
  %v623 = vpop.f32.mrb[0].mxu0
  %v624 = vpop.f32.mrb[0].mxu0
  %v625 = vadd.f32 %v116, %v624
  %v626 = vpop.f32.mrb[0].mxu0
  %627 = vmatprep.mubr.bf16.mxu0 0
  %628 = vmatmul.mubr.bf16.gmra.mrb[0].mxu0 %v361
  %v629 = vpop.f32.mrb[0].mxu0
  %v630 = vadd.f32 %v116, %v629
  %v631 = vpop.f32.mrb[0].mxu0
  %v632 = vpop.f32.mrb[0].mxu0
  %v633 = vadd.f32 %v116, %v632
  %v634 = vpop.f32.mrb[0].mxu0
  %635 = vmatprep.mubr.bf16.mxu0 0
  %636 = vmatmul.mubr.bf16.gmra.mrb[0].mxu0 %v364
  %v637 = vpop.f32.mrb[0].mxu0
  %v638 = vadd.f32 %v116, %v637
  %v639 = vpop.f32.mrb[0].mxu0
  %v640 = vpop.f32.mrb[0].mxu0
  %v641 = vadd.f32 %v116, %v640
  %v642 = vpop.f32.mrb[0].mxu0
  %643 = vmatprep.mubr.bf16.mxu0 0
  %644 = vmatmul.mubr.bf16.gmra.mrb[0].mxu0 %v367
  %v645 = vpop.f32.mrb[0].mxu0
  %v646 = vadd.f32 %v116, %v645
  %v647 = vpop.f32.mrb[0].mxu0
  %v648 = vpop.f32.mrb[0].mxu0
  %v649 = vadd.f32 %v116, %v648
  %v650 = vpop.f32.mrb[0].mxu0
  %651 = vmatprep.mubr.bf16.mxu0 0
  %652 = vmatmul.mubr.bf16.gmra.mrb[0].mxu0 %v370
  %v653 = vpop.f32.mrb[0].mxu0
  %v654 = vadd.f32 %v116, %v653
  %v655 = vpop.f32.mrb[0].mxu0
  %v656 = vpop.f32.mrb[0].mxu0
  %v657 = vadd.f32 %v116, %v656
  %v658 = vpop.f32.mrb[0].mxu0
  %659 = vmatprep.mubr.bf16.mxu0 0
  %660 = vmatmul.mubr.bf16.gmra.mrb[0].mxu0 %v373
  %v661 = vpop.f32.mrb[0].mxu0
  %v662 = vadd.f32 %v116, %v661
  %v663 = vpop.f32.mrb[0].mxu0
  %v664 = vpop.f32.mrb[0].mxu0
  %v665 = vadd.f32 %v116, %v664
  %v666 = vpop.f32.mrb[0].mxu0
  %667 = vdwg.mxu0
  %v668 = vmax.f32 %v414, 0.0
  %v669 = vmax.f32 %v417, 0.0
  %v670 = vmax.f32 %v422, 0.0
  %v671 = vmax.f32 %v425, 0.0
  %v672 = vmax.f32 %v430, 0.0
  %v673 = vmax.f32 %v433, 0.0
  %v674 = vmax.f32 %v438, 0.0
  %v675 = vmax.f32 %v441, 0.0
  %v676 = vmax.f32 %v446, 0.0
  %v677 = vmax.f32 %v449, 0.0
  %v678 = vmax.f32 %v454, 0.0
  %v679 = vmax.f32 %v457, 0.0
  %v680 = vmax.f32 %v462, 0.0
  %v681 = vmax.f32 %v465, 0.0
  %v682 = vmax.f32 %v470, 0.0
  %v683 = vmax.f32 %v473, 0.0
  %v684 = vmax.f32 %v478, 0.0
  %v685 = vmax.f32 %v481, 0.0
  %v686 = vmax.f32 %v486, 0.0
  %v687 = vmax.f32 %v489, 0.0
  %v688 = vmax.f32 %v494, 0.0
  %v689 = vmax.f32 %v497, 0.0
  %v690 = vmax.f32 %v502, 0.0
  %v691 = vmax.f32 %v505, 0.0
  %v692 = vmax.f32 %v510, 0.0
  %v693 = vmax.f32 %v513, 0.0
  %v694 = vmax.f32 %v518, 0.0
  %v695 = vmax.f32 %v521, 0.0
  %v696 = vmax.f32 %v526, 0.0
  %v697 = vmax.f32 %v529, 0.0
  %v698 = vmax.f32 %v534, 0.0
  %v699 = vmax.f32 %v537, 0.0
  %v700 = vmax.f32 %v542, 0.0
  %v701 = vmax.f32 %v545, 0.0
  %v702 = vmax.f32 %v550, 0.0
  %v703 = vmax.f32 %v553, 0.0
  %v704 = vmax.f32 %v558, 0.0
  %v705 = vmax.f32 %v561, 0.0
  %v706 = vmax.f32 %v566, 0.0
  %v707 = vmax.f32 %v569, 0.0
  %v708 = vmax.f32 %v574, 0.0
  %v709 = vmax.f32 %v577, 0.0
  %v710 = vmax.f32 %v582, 0.0
  %v711 = vmax.f32 %v585, 0.0
  %v712 = vmax.f32 %v590, 0.0
  %v713 = vmax.f32 %v593, 0.0
  %v714 = vmax.f32 %v598, 0.0
  %v715 = vmax.f32 %v601, 0.0
  %v716 = vmax.f32 %v606, 0.0
  %v717 = vmax.f32 %v609, 0.0
  %v718 = vmax.f32 %v614, 0.0
  %v719 = vmax.f32 %v617, 0.0
  %v720 = vmax.f32 %v622, 0.0
  %v721 = vmax.f32 %v625, 0.0
  %v722 = vmax.f32 %v630, 0.0
  %v723 = vmax.f32 %v633, 0.0
  %v724 = vmax.f32 %v638, 0.0
  %v725 = vmax.f32 %v641, 0.0
  %v726 = vmax.f32 %v646, 0.0
  %v727 = vmax.f32 %v649, 0.0
  %v728 = vmax.f32 %v654, 0.0
  %v729 = vmax.f32 %v657, 0.0
  %v730 = vmax.f32 %v662, 0.0
  %v731 = vmax.f32 %v665, 0.0
  %vm732 = vcmask 64512
  %v733 = vsel %vm732, %v668, 0.0
  %v734 = vsel %vm732, %v669, 0.0
  %v735 = vadd.f32 %v733, %v734
  %v736 = vsel %vm732, %v670, 0.0
  %v737 = vadd.f32 %v735, %v736
  %v738 = vsel %vm732, %v671, 0.0
  %v739 = vadd.f32 %v737, %v738
  %v740 = vsel %vm732, %v672, 0.0
  %v741 = vadd.f32 %v739, %v740
  %v742 = vsel %vm732, %v673, 0.0
  %v743 = vadd.f32 %v741, %v742
  %v744 = vsel %vm732, %v674, 0.0
  %v745 = vadd.f32 %v743, %v744
  %v746 = vsel %vm732, %v675, 0.0
  %v747 = vadd.f32 %v745, %v746
  %v748 = vsel %vm732, %v676, 0.0
  %v749 = vadd.f32 %v747, %v748
  %v750 = vsel %vm732, %v677, 0.0
  %v751 = vadd.f32 %v749, %v750
  %v752 = vsel %vm732, %v678, 0.0
  %v753 = vadd.f32 %v751, %v752
  %v754 = vsel %vm732, %v679, 0.0
  %v755 = vadd.f32 %v753, %v754
  %v756 = vsel %vm732, %v680, 0.0
  %v757 = vadd.f32 %v755, %v756
  %v758 = vsel %vm732, %v681, 0.0
  %v759 = vadd.f32 %v757, %v758
  %v760 = vsel %vm732, %v682, 0.0
  %v761 = vadd.f32 %v759, %v760
  %v762 = vsel %vm732, %v683, 0.0
  %v763 = vadd.f32 %v761, %v762
  %v764 = vsel %vm732, %v684, 0.0
  %v765 = vadd.f32 %v763, %v764
  %v766 = vsel %vm732, %v685, 0.0
  %v767 = vadd.f32 %v765, %v766
  %v768 = vsel %vm732, %v686, 0.0
  %v769 = vadd.f32 %v767, %v768
  %v770 = vsel %vm732, %v687, 0.0
  %v771 = vadd.f32 %v769, %v770
  %v772 = vsel %vm732, %v688, 0.0
  %v773 = vadd.f32 %v771, %v772
  %v774 = vsel %vm732, %v689, 0.0
  %v775 = vadd.f32 %v773, %v774
  %v776 = vsel %vm732, %v690, 0.0
  %v777 = vadd.f32 %v775, %v776
  %v778 = vsel %vm732, %v691, 0.0
  %v779 = vadd.f32 %v777, %v778
  %v780 = vsel %vm732, %v692, 0.0
  %v781 = vadd.f32 %v779, %v780
  %v782 = vsel %vm732, %v693, 0.0
  %v783 = vadd.f32 %v781, %v782
  %v784 = vsel %vm732, %v694, 0.0
  %v785 = vadd.f32 %v783, %v784
  %v786 = vsel %vm732, %v695, 0.0
  %v787 = vadd.f32 %v785, %v786
  %v788 = vsel %vm732, %v696, 0.0
  %v789 = vadd.f32 %v787, %v788
  %v790 = vsel %vm732, %v697, 0.0
  %v791 = vadd.f32 %v789, %v790
  %v792 = vsel %vm732, %v698, 0.0
  %v793 = vadd.f32 %v791, %v792
  %v794 = vsel %vm732, %v699, 0.0
  %v795 = vadd.f32 %v793, %v794
  %v796 = vrot.slane %v795, 4
  %v797 = vadd.f32 %v795, %v796
  %v798 = vrot.slane %v797, 2
  %v799 = vadd.f32 %v797, %v798
  %v800 = vrot.slane %v799, 1
  %v801 = vadd.f32 %v799, %v800
  %v802 = vsel %vm732, %v700, 0.0
  %v803 = vsel %vm732, %v701, 0.0
  %v804 = vadd.f32 %v802, %v803
  %v805 = vsel %vm732, %v702, 0.0
  %v806 = vadd.f32 %v804, %v805
  %v807 = vsel %vm732, %v703, 0.0
  %v808 = vadd.f32 %v806, %v807
  %v809 = vsel %vm732, %v704, 0.0
  %v810 = vadd.f32 %v808, %v809
  %v811 = vsel %vm732, %v705, 0.0
  %v812 = vadd.f32 %v810, %v811
  %v813 = vsel %vm732, %v706, 0.0
  %v814 = vadd.f32 %v812, %v813
  %v815 = vsel %vm732, %v707, 0.0
  %v816 = vadd.f32 %v814, %v815
  %v817 = vsel %vm732, %v708, 0.0
  %v818 = vadd.f32 %v816, %v817
  %v819 = vsel %vm732, %v709, 0.0
  %v820 = vadd.f32 %v818, %v819
  %v821 = vsel %vm732, %v710, 0.0
  %v822 = vadd.f32 %v820, %v821
  %v823 = vsel %vm732, %v711, 0.0
  %v824 = vadd.f32 %v822, %v823
  %v825 = vsel %vm732, %v712, 0.0
  %v826 = vadd.f32 %v824, %v825
  %v827 = vsel %vm732, %v713, 0.0
  %v828 = vadd.f32 %v826, %v827
  %v829 = vsel %vm732, %v714, 0.0
  %v830 = vadd.f32 %v828, %v829
  %v831 = vsel %vm732, %v715, 0.0
  %v832 = vadd.f32 %v830, %v831
  %v833 = vsel %vm732, %v716, 0.0
  %v834 = vadd.f32 %v832, %v833
  %v835 = vsel %vm732, %v717, 0.0
  %v836 = vadd.f32 %v834, %v835
  %v837 = vsel %vm732, %v718, 0.0
  %v838 = vadd.f32 %v836, %v837
  %v839 = vsel %vm732, %v719, 0.0
  %v840 = vadd.f32 %v838, %v839
  %v841 = vsel %vm732, %v720, 0.0
  %v842 = vadd.f32 %v840, %v841
  %v843 = vsel %vm732, %v721, 0.0
  %v844 = vadd.f32 %v842, %v843
  %v845 = vsel %vm732, %v722, 0.0
  %v846 = vadd.f32 %v844, %v845
  %v847 = vsel %vm732, %v723, 0.0
  %v848 = vadd.f32 %v846, %v847
  %v849 = vsel %vm732, %v724, 0.0
  %v850 = vadd.f32 %v848, %v849
  %v851 = vsel %vm732, %v725, 0.0
  %v852 = vadd.f32 %v850, %v851
  %v853 = vsel %vm732, %v726, 0.0
  %v854 = vadd.f32 %v852, %v853
  %v855 = vsel %vm732, %v727, 0.0
  %v856 = vadd.f32 %v854, %v855
  %v857 = vsel %vm732, %v728, 0.0
  %v858 = vadd.f32 %v856, %v857
  %v859 = vsel %vm732, %v729, 0.0
  %v860 = vadd.f32 %v858, %v859
  %v861 = vsel %vm732, %v730, 0.0
  %v862 = vadd.f32 %v860, %v861
  %v863 = vsel %vm732, %v731, 0.0
  %v864 = vadd.f32 %v862, %v863
  %v865 = vrot.slane %v864, 4
  %v866 = vadd.f32 %v864, %v865
  %v867 = vrot.slane %v866, 2
  %v868 = vadd.f32 %v866, %v867
  %v869 = vrot.slane %v868, 1
  %v870 = vadd.f32 %v868, %v869
  %v871 = vmul.f32 %v801, 0.00390625
  %v872 = vmul.f32 %v870, 0.00390625
  %v873 = vpack.c.bf16 %v871, %v871
  %v874 = vpack.c.bf16 %v872, %v872
  %v875 = vld [vmem:[%s4] sm:$0xff]
  %v876 = vpack.c.bf16 %v875, %v875
  %v877 = vld [vmem:[%s5] sm:$0x1]
  %v879 = vlaneseq
  %v880 = vshrl.u32 %v879, 7
  %v881 = vsub.s32 0, %v880
  %v882 = vrot.slane %v877, %v881
  %v886 = vunpack.c.l.b16 %v873
  %v887 = vunpack.c.l.b16 %v874
  %vm888 = vcmask 1041409
  %v889 = vsel %vm888, %v887, %v886
  %v890 = vpack.c.b16 %v889, %v889
  %v892 = vsel %vm732, %v890, 0
  %vm894 = vcmask 1043456
  %v896 = vsel %vm894, %v876, 0
  %898 = vmatprep.subr.bf16.mxu0 0
  %899 = vmatpush1.bf16.msra.mxu0 %v896
  %900 = vmatprep.subr.bf16.mxu0 0
  %901 = vmatpush1.bf16.msra.mxu0 0
  %902 = vmatprep.subr.bf16.mxu0 0
  %903 = vmatpush1.bf16.msra.mxu0 0
  %904 = vmatprep.subr.bf16.mxu0 0
  %905 = vmatpush1.bf16.msra.mxu0 0
  %906 = vmatprep.subr.bf16.mxu0 0
  %907 = vmatpush1.bf16.msra.mxu0 0
  %908 = vmatprep.subr.bf16.mxu0 0
  %909 = vmatpush1.bf16.msra.mxu0 0
  %910 = vmatprep.subr.bf16.mxu0 0
  %911 = vmatpush1.bf16.msra.mxu0 0
  %912 = vmatprep.subr.bf16.mxu0 0
  %913 = vmatpush1.bf16.msra.mxu0 0
  %914 = vmatprep.subr.bf16.mxu0 0
  %915 = vmatpush1.bf16.msra.mxu0 0
  %916 = vmatprep.subr.bf16.mxu0 0
  %917 = vmatpush1.bf16.msra.mxu0 0
  %918 = vmatprep.subr.bf16.mxu0 0
  %919 = vmatpush1.bf16.msra.mxu0 0
  %920 = vmatprep.subr.bf16.mxu0 0
  %921 = vmatpush1.bf16.msra.mxu0 0
  %922 = vmatprep.subr.bf16.mxu0 0
  %923 = vmatpush1.bf16.msra.mxu0 0
  %924 = vmatprep.subr.bf16.mxu0 0
  %925 = vmatpush1.bf16.msra.mxu0 0
  %926 = vmatprep.subr.bf16.mxu0 0
  %927 = vmatpush1.bf16.msra.mxu0 0
  %928 = vmatprep.subr.bf16.mxu0 0
  %929 = vmatpush1.bf16.msra.mxu0 0
  %930 = vmatprep.mubr.bf16.mxu0 0
  %931 = vmatmul.mubr.bf16.gmra.mrb[0].mxu0 %v892
  %v932 = vpop.f32.mrb[0].mxu0
  %v933 = vadd.f32 %v882, %v932
  %v934 = vpop.f32.mrb[0].mxu0
  %v935 = vpop.f32.mrb[0].mxu0
  %v936 = vpop.f32.mrb[0].mxu0
  %937 = vdwg.mxu0
  %v938 = vld [vmem:[%s1] sm:$0xf]
  %v939 = vld [vmem:[%s1 + $0x4] sm:$0xf]
  %v940 = vld [vmem:[%s1 + $0x8] sm:$0xf]
  %v941 = vld [vmem:[%s1 + $0xc] sm:$0xf]
  %v942 = vld [vmem:[%s1 + $0x10] sm:$0xf]
  %v943 = vld [vmem:[%s1 + $0x14] sm:$0xf]
  %v944 = vld [vmem:[%s1 + $0x18] sm:$0xf]
  %v945 = vld [vmem:[%s1 + $0x1c] sm:$0xf]
  %v946 = vld [vmem:[%s1 + $0x20] sm:$0xf]
  %v947 = vld [vmem:[%s1 + $0x24] sm:$0xf]
  %v948 = vld [vmem:[%s1 + $0x28] sm:$0xf]
  %v949 = vld [vmem:[%s1 + $0x2c] sm:$0xf]
  %v950 = vld [vmem:[%s1 + $0x30] sm:$0xf]
  %v951 = vld [vmem:[%s1 + $0x34] sm:$0xf]
  %v952 = vld [vmem:[%s1 + $0x38] sm:$0xf]
  %v953 = vld [vmem:[%s1 + $0x3c] sm:$0xf]
  %v954 = vld [vmem:[%s1 + $0x40] sm:$0xf]
  %v955 = vld [vmem:[%s1 + $0x44] sm:$0xf]
  %v956 = vld [vmem:[%s1 + $0x48] sm:$0xf]
  %v957 = vld [vmem:[%s1 + $0x4c] sm:$0xf]
  %v958 = vld [vmem:[%s1 + $0x50] sm:$0xf]
  %v959 = vld [vmem:[%s1 + $0x54] sm:$0xf]
  %v960 = vld [vmem:[%s1 + $0x58] sm:$0xf]
  %v961 = vld [vmem:[%s1 + $0x5c] sm:$0xf]
  %v962 = vld [vmem:[%s1 + $0x60] sm:$0xf]
  %v963 = vld [vmem:[%s1 + $0x64] sm:$0xf]
  %v964 = vld [vmem:[%s1 + $0x68] sm:$0xf]
  %v965 = vld [vmem:[%s1 + $0x6c] sm:$0xf]
  %v966 = vld [vmem:[%s1 + $0x70] sm:$0xf]
  %v967 = vld [vmem:[%s1 + $0x74] sm:$0xf]
  %v968 = vld [vmem:[%s1 + $0x78] sm:$0xf]
  %v969 = vld [vmem:[%s1 + $0x7c] sm:$0xf]
  %v970 = vld [vmem:[%s1 + $0x80] sm:$0xf]
  %v971 = vld [vmem:[%s1 + $0x84] sm:$0xf]
  %v972 = vld [vmem:[%s1 + $0x88] sm:$0xf]
  %v973 = vld [vmem:[%s1 + $0x8c] sm:$0xf]
  %v974 = vld [vmem:[%s1 + $0x90] sm:$0xf]
  %v975 = vld [vmem:[%s1 + $0x94] sm:$0xf]
  %v976 = vld [vmem:[%s1 + $0x98] sm:$0xf]
  %v977 = vld [vmem:[%s1 + $0x9c] sm:$0xf]
  %v978 = vld [vmem:[%s1 + $0xa0] sm:$0xf]
  %v979 = vld [vmem:[%s1 + $0xa4] sm:$0xf]
  %v980 = vld [vmem:[%s1 + $0xa8] sm:$0xf]
  %v981 = vld [vmem:[%s1 + $0xac] sm:$0xf]
  %v982 = vld [vmem:[%s1 + $0xb0] sm:$0xf]
  %v983 = vld [vmem:[%s1 + $0xb4] sm:$0xf]
  %v984 = vld [vmem:[%s1 + $0xb8] sm:$0xf]
  %v985 = vld [vmem:[%s1 + $0xbc] sm:$0xf]
  %v986 = vld [vmem:[%s1 + $0xc0] sm:$0xf]
  %v987 = vld [vmem:[%s1 + $0xc4] sm:$0xf]
  %v988 = vld [vmem:[%s1 + $0xc8] sm:$0xf]
  %v989 = vld [vmem:[%s1 + $0xcc] sm:$0xf]
  %v990 = vld [vmem:[%s1 + $0xd0] sm:$0xf]
  %v991 = vld [vmem:[%s1 + $0xd4] sm:$0xf]
  %v992 = vld [vmem:[%s1 + $0xd8] sm:$0xf]
  %v993 = vld [vmem:[%s1 + $0xdc] sm:$0xf]
  %v994 = vld [vmem:[%s1 + $0xe0] sm:$0xf]
  %v995 = vld [vmem:[%s1 + $0xe4] sm:$0xf]
  %v996 = vld [vmem:[%s1 + $0xe8] sm:$0xf]
  %v997 = vld [vmem:[%s1 + $0xec] sm:$0xf]
  %v998 = vld [vmem:[%s1 + $0xf0] sm:$0xf]
  %v999 = vld [vmem:[%s1 + $0xf4] sm:$0xf]
  %v1000 = vld [vmem:[%s1 + $0xf8] sm:$0xf]
  %v1001 = vld [vmem:[%s1 + $0xfc] sm:$0xf]
  %v1002 = vld [vmem:[%s6] sm:$0xff]
  %v1003 = vld [vmem:[%s6 + $0x8] sm:$0xff]
  %v1004 = vld [vmem:[%s6 + $0x10] sm:$0xff]
  %v1005 = vld [vmem:[%s6 + $0x18] sm:$0xff]
  %v1006 = vld [vmem:[%s6 + $0x20] sm:$0xf]
  %v1007 = vpack.c.bf16 %v1003, %v1002
  %v1008 = vpack.c.bf16 %v1005, %v1004
  %v1009 = vpack.c.bf16 %v1006, %v1006
  %v1010 = vld [vmem:[%s7] sm:$0x1]
  %v1012 = vlaneseq
  %v1013 = vshrl.u32 %v1012, 7
  %v1014 = vsub.s32 0, %v1013
  %v1015 = vrot.slane %v1010, %v1014
  %v1081 = vunpack.c.l.b16 %v938
  %v1082 = vunpack.c.l.b16 %v939
  %v1083 = vunpack.c.l.b16 %v940
  %v1084 = vunpack.c.l.b16 %v941
  %v1085 = vunpack.c.l.b16 %v942
  %v1086 = vunpack.c.l.b16 %v943
  %v1087 = vunpack.c.l.b16 %v944
  %v1088 = vunpack.c.l.b16 %v945
  %v1089 = vunpack.c.l.b16 %v946
  %v1090 = vunpack.c.l.b16 %v947
  %v1091 = vunpack.c.l.b16 %v948
  %v1092 = vunpack.c.l.b16 %v949
  %v1093 = vunpack.c.l.b16 %v950
  %v1094 = vunpack.c.l.b16 %v951
  %v1095 = vunpack.c.l.b16 %v952
  %v1096 = vunpack.c.l.b16 %v953
  %v1097 = vunpack.c.l.b16 %v954
  %v1098 = vunpack.c.l.b16 %v955
  %v1099 = vunpack.c.l.b16 %v956
  %v1100 = vunpack.c.l.b16 %v957
  %v1101 = vunpack.c.l.b16 %v958
  %v1102 = vunpack.c.l.b16 %v959
  %v1103 = vunpack.c.l.b16 %v960
  %v1104 = vunpack.c.l.b16 %v961
  %v1105 = vunpack.c.l.b16 %v962
  %v1106 = vunpack.c.l.b16 %v963
  %v1107 = vunpack.c.l.b16 %v964
  %v1108 = vunpack.c.l.b16 %v965
  %v1109 = vunpack.c.l.b16 %v966
  %v1110 = vunpack.c.l.b16 %v967
  %v1111 = vunpack.c.l.b16 %v968
  %v1112 = vunpack.c.l.b16 %v969
  %v1113 = vunpack.c.l.b16 %v970
  %v1114 = vunpack.c.l.b16 %v971
  %v1115 = vunpack.c.l.b16 %v972
  %v1116 = vunpack.c.l.b16 %v973
  %v1117 = vunpack.c.l.b16 %v974
  %v1118 = vunpack.c.l.b16 %v975
  %v1119 = vunpack.c.l.b16 %v976
  %v1120 = vunpack.c.l.b16 %v977
  %v1121 = vunpack.c.l.b16 %v978
  %v1122 = vunpack.c.l.b16 %v979
  %v1123 = vunpack.c.l.b16 %v980
  %v1124 = vunpack.c.l.b16 %v981
  %v1125 = vunpack.c.l.b16 %v982
  %v1126 = vunpack.c.l.b16 %v983
  %v1127 = vunpack.c.l.b16 %v984
  %v1128 = vunpack.c.l.b16 %v985
  %v1129 = vunpack.c.l.b16 %v986
  %v1130 = vunpack.c.l.b16 %v987
  %v1131 = vunpack.c.l.b16 %v988
  %v1132 = vunpack.c.l.b16 %v989
  %v1133 = vunpack.c.l.b16 %v990
  %v1134 = vunpack.c.l.b16 %v991
  %v1135 = vunpack.c.l.b16 %v992
  %v1136 = vunpack.c.l.b16 %v993
  %v1137 = vunpack.c.l.b16 %v994
  %v1138 = vunpack.c.l.b16 %v995
  %v1139 = vunpack.c.l.b16 %v996
  %v1140 = vunpack.c.l.b16 %v997
  %v1141 = vunpack.c.l.b16 %v998
  %v1142 = vunpack.c.l.b16 %v999
  %v1143 = vunpack.c.l.b16 %v1000
  %v1144 = vunpack.c.l.b16 %v1001
  %v1145 = vpack.c.b16 %v1082, %v1081
  %v1146 = vpack.c.b16 %v1084, %v1083
  %v1147 = vpack.c.b16 %v1086, %v1085
  %v1148 = vpack.c.b16 %v1088, %v1087
  %v1149 = vpack.c.b16 %v1090, %v1089
  %v1150 = vpack.c.b16 %v1092, %v1091
  %v1151 = vpack.c.b16 %v1094, %v1093
  %v1152 = vpack.c.b16 %v1096, %v1095
  %v1153 = vpack.c.b16 %v1098, %v1097
  %v1154 = vpack.c.b16 %v1100, %v1099
  %v1155 = vpack.c.b16 %v1102, %v1101
  %v1156 = vpack.c.b16 %v1104, %v1103
  %v1157 = vpack.c.b16 %v1106, %v1105
  %v1158 = vpack.c.b16 %v1108, %v1107
  %v1159 = vpack.c.b16 %v1110, %v1109
  %v1160 = vpack.c.b16 %v1112, %v1111
  %v1161 = vpack.c.b16 %v1114, %v1113
  %v1162 = vpack.c.b16 %v1116, %v1115
  %v1163 = vpack.c.b16 %v1118, %v1117
  %v1164 = vpack.c.b16 %v1120, %v1119
  %v1165 = vpack.c.b16 %v1122, %v1121
  %v1166 = vpack.c.b16 %v1124, %v1123
  %v1167 = vpack.c.b16 %v1126, %v1125
  %v1168 = vpack.c.b16 %v1128, %v1127
  %v1169 = vpack.c.b16 %v1130, %v1129
  %v1170 = vpack.c.b16 %v1132, %v1131
  %v1171 = vpack.c.b16 %v1134, %v1133
  %v1172 = vpack.c.b16 %v1136, %v1135
  %v1173 = vpack.c.b16 %v1138, %v1137
  %v1174 = vpack.c.b16 %v1140, %v1139
  %v1175 = vpack.c.b16 %v1142, %v1141
  %v1176 = vpack.c.b16 %v1144, %v1143
  %v1178 = vsel %vm278, %v1145, 0
  %v1181 = vsel %vm278, %v1146, 0
  %v1184 = vsel %vm278, %v1147, 0
  %v1187 = vsel %vm278, %v1148, 0
  %v1190 = vsel %vm278, %v1149, 0
  %v1193 = vsel %vm278, %v1150, 0
  %v1196 = vsel %vm278, %v1151, 0
  %v1199 = vsel %vm278, %v1152, 0
  %v1202 = vsel %vm278, %v1153, 0
  %v1205 = vsel %vm278, %v1154, 0
  %v1208 = vsel %vm278, %v1155, 0
  %v1211 = vsel %vm278, %v1156, 0
  %v1214 = vsel %vm278, %v1157, 0
  %v1217 = vsel %vm278, %v1158, 0
  %v1220 = vsel %vm278, %v1159, 0
  %v1223 = vsel %vm278, %v1160, 0
  %v1226 = vsel %vm278, %v1161, 0
  %v1229 = vsel %vm278, %v1162, 0
  %v1232 = vsel %vm278, %v1163, 0
  %v1235 = vsel %vm278, %v1164, 0
  %v1238 = vsel %vm278, %v1165, 0
  %v1241 = vsel %vm278, %v1166, 0
  %v1244 = vsel %vm278, %v1167, 0
  %v1247 = vsel %vm278, %v1168, 0
  %v1250 = vsel %vm278, %v1169, 0
  %v1253 = vsel %vm278, %v1170, 0
  %v1256 = vsel %vm278, %v1171, 0
  %v1259 = vsel %vm278, %v1172, 0
  %v1262 = vsel %vm278, %v1173, 0
  %v1265 = vsel %vm278, %v1174, 0
  %v1268 = vsel %vm278, %v1175, 0
  %v1271 = vsel %vm278, %v1176, 0
  %v1274 = vsel %vm375, %v1009, 0
  %1276 = vmatprep.subr.bf16.mxu0 0
  %1277 = vmatpush1.bf16.msra.mxu0 %v1007
  %1278 = vmatprep.subr.bf16.mxu0 0
  %1279 = vmatpush1.bf16.msra.mxu0 %v1008
  %1280 = vmatprep.subr.bf16.mxu0 0
  %1281 = vmatpush1.bf16.msra.mxu0 %v1274
  %1282 = vmatprep.subr.bf16.mxu0 0
  %1283 = vmatpush1.bf16.msra.mxu0 0
  %1284 = vmatprep.subr.bf16.mxu0 0
  %1285 = vmatpush1.bf16.msra.mxu0 0
  %1286 = vmatprep.subr.bf16.mxu0 0
  %1287 = vmatpush1.bf16.msra.mxu0 0
  %1288 = vmatprep.subr.bf16.mxu0 0
  %1289 = vmatpush1.bf16.msra.mxu0 0
  %1290 = vmatprep.subr.bf16.mxu0 0
  %1291 = vmatpush1.bf16.msra.mxu0 0
  %1292 = vmatprep.subr.bf16.mxu0 0
  %1293 = vmatpush1.bf16.msra.mxu0 0
  %1294 = vmatprep.subr.bf16.mxu0 0
  %1295 = vmatpush1.bf16.msra.mxu0 0
  %1296 = vmatprep.subr.bf16.mxu0 0
  %1297 = vmatpush1.bf16.msra.mxu0 0
  %1298 = vmatprep.subr.bf16.mxu0 0
  %1299 = vmatpush1.bf16.msra.mxu0 0
  %1300 = vmatprep.subr.bf16.mxu0 0
  %1301 = vmatpush1.bf16.msra.mxu0 0
  %1302 = vmatprep.subr.bf16.mxu0 0
  %1303 = vmatpush1.bf16.msra.mxu0 0
  %1304 = vmatprep.subr.bf16.mxu0 0
  %1305 = vmatpush1.bf16.msra.mxu0 0
  %1306 = vmatprep.subr.bf16.mxu0 0
  %1307 = vmatpush1.bf16.msra.mxu0 0
  %1308 = vmatprep.mubr.bf16.mxu0 0
  %1309 = vmatmul.mubr.bf16.gmra.mrb[0].mxu0 %v1178
  %v1310 = vpop.f32.mrb[0].mxu0
  %v1311 = vadd.f32 %v1015, %v1310
  %v1312 = vpop.f32.mrb[0].mxu0
  %v1313 = vpop.f32.mrb[0].mxu0
  %v1314 = vadd.f32 %v1015, %v1313
  %v1315 = vpop.f32.mrb[0].mxu0
  %1316 = vmatprep.mubr.bf16.mxu0 0
  %1317 = vmatmul.mubr.bf16.gmra.mrb[0].mxu0 %v1181
  %v1318 = vpop.f32.mrb[0].mxu0
  %v1319 = vadd.f32 %v1015, %v1318
  %v1320 = vpop.f32.mrb[0].mxu0
  %v1321 = vpop.f32.mrb[0].mxu0
  %v1322 = vadd.f32 %v1015, %v1321
  %v1323 = vpop.f32.mrb[0].mxu0
  %1324 = vmatprep.mubr.bf16.mxu0 0
  %1325 = vmatmul.mubr.bf16.gmra.mrb[0].mxu0 %v1184
  %v1326 = vpop.f32.mrb[0].mxu0
  %v1327 = vadd.f32 %v1015, %v1326
  %v1328 = vpop.f32.mrb[0].mxu0
  %v1329 = vpop.f32.mrb[0].mxu0
  %v1330 = vadd.f32 %v1015, %v1329
  %v1331 = vpop.f32.mrb[0].mxu0
  %1332 = vmatprep.mubr.bf16.mxu0 0
  %1333 = vmatmul.mubr.bf16.gmra.mrb[0].mxu0 %v1187
  %v1334 = vpop.f32.mrb[0].mxu0
  %v1335 = vadd.f32 %v1015, %v1334
  %v1336 = vpop.f32.mrb[0].mxu0
  %v1337 = vpop.f32.mrb[0].mxu0
  %v1338 = vadd.f32 %v1015, %v1337
  %v1339 = vpop.f32.mrb[0].mxu0
  %1340 = vmatprep.mubr.bf16.mxu0 0
  %1341 = vmatmul.mubr.bf16.gmra.mrb[0].mxu0 %v1190
  %v1342 = vpop.f32.mrb[0].mxu0
  %v1343 = vadd.f32 %v1015, %v1342
  %v1344 = vpop.f32.mrb[0].mxu0
  %v1345 = vpop.f32.mrb[0].mxu0
  %v1346 = vadd.f32 %v1015, %v1345
  %v1347 = vpop.f32.mrb[0].mxu0
  %1348 = vmatprep.mubr.bf16.mxu0 0
  %1349 = vmatmul.mubr.bf16.gmra.mrb[0].mxu0 %v1193
  %v1350 = vpop.f32.mrb[0].mxu0
  %v1351 = vadd.f32 %v1015, %v1350
  %v1352 = vpop.f32.mrb[0].mxu0
  %v1353 = vpop.f32.mrb[0].mxu0
  %v1354 = vadd.f32 %v1015, %v1353
  %v1355 = vpop.f32.mrb[0].mxu0
  %1356 = vmatprep.mubr.bf16.mxu0 0
  %1357 = vmatmul.mubr.bf16.gmra.mrb[0].mxu0 %v1196
  %v1358 = vpop.f32.mrb[0].mxu0
  %v1359 = vadd.f32 %v1015, %v1358
  %v1360 = vpop.f32.mrb[0].mxu0
  %v1361 = vpop.f32.mrb[0].mxu0
  %v1362 = vadd.f32 %v1015, %v1361
  %v1363 = vpop.f32.mrb[0].mxu0
  %1364 = vmatprep.mubr.bf16.mxu0 0
  %1365 = vmatmul.mubr.bf16.gmra.mrb[0].mxu0 %v1199
  %v1366 = vpop.f32.mrb[0].mxu0
  %v1367 = vadd.f32 %v1015, %v1366
  %v1368 = vpop.f32.mrb[0].mxu0
  %v1369 = vpop.f32.mrb[0].mxu0
  %v1370 = vadd.f32 %v1015, %v1369
  %v1371 = vpop.f32.mrb[0].mxu0
  %1372 = vmatprep.mubr.bf16.mxu0 0
  %1373 = vmatmul.mubr.bf16.gmra.mrb[0].mxu0 %v1202
  %v1374 = vpop.f32.mrb[0].mxu0
  %v1375 = vadd.f32 %v1015, %v1374
  %v1376 = vpop.f32.mrb[0].mxu0
  %v1377 = vpop.f32.mrb[0].mxu0
  %v1378 = vadd.f32 %v1015, %v1377
  %v1379 = vpop.f32.mrb[0].mxu0
  %1380 = vmatprep.mubr.bf16.mxu0 0
  %1381 = vmatmul.mubr.bf16.gmra.mrb[0].mxu0 %v1205
  %v1382 = vpop.f32.mrb[0].mxu0
  %v1383 = vadd.f32 %v1015, %v1382
  %v1384 = vpop.f32.mrb[0].mxu0
  %v1385 = vpop.f32.mrb[0].mxu0
  %v1386 = vadd.f32 %v1015, %v1385
  %v1387 = vpop.f32.mrb[0].mxu0
  %1388 = vmatprep.mubr.bf16.mxu0 0
  %1389 = vmatmul.mubr.bf16.gmra.mrb[0].mxu0 %v1208
  %v1390 = vpop.f32.mrb[0].mxu0
  %v1391 = vadd.f32 %v1015, %v1390
  %v1392 = vpop.f32.mrb[0].mxu0
  %v1393 = vpop.f32.mrb[0].mxu0
  %v1394 = vadd.f32 %v1015, %v1393
  %v1395 = vpop.f32.mrb[0].mxu0
  %1396 = vmatprep.mubr.bf16.mxu0 0
  %1397 = vmatmul.mubr.bf16.gmra.mrb[0].mxu0 %v1211
  %v1398 = vpop.f32.mrb[0].mxu0
  %v1399 = vadd.f32 %v1015, %v1398
  %v1400 = vpop.f32.mrb[0].mxu0
  %v1401 = vpop.f32.mrb[0].mxu0
  %v1402 = vadd.f32 %v1015, %v1401
  %v1403 = vpop.f32.mrb[0].mxu0
  %1404 = vmatprep.mubr.bf16.mxu0 0
  %1405 = vmatmul.mubr.bf16.gmra.mrb[0].mxu0 %v1214
  %v1406 = vpop.f32.mrb[0].mxu0
  %v1407 = vadd.f32 %v1015, %v1406
  %v1408 = vpop.f32.mrb[0].mxu0
  %v1409 = vpop.f32.mrb[0].mxu0
  %v1410 = vadd.f32 %v1015, %v1409
  %v1411 = vpop.f32.mrb[0].mxu0
  %1412 = vmatprep.mubr.bf16.mxu0 0
  %1413 = vmatmul.mubr.bf16.gmra.mrb[0].mxu0 %v1217
  %v1414 = vpop.f32.mrb[0].mxu0
  %v1415 = vadd.f32 %v1015, %v1414
  %v1416 = vpop.f32.mrb[0].mxu0
  %v1417 = vpop.f32.mrb[0].mxu0
  %v1418 = vadd.f32 %v1015, %v1417
  %v1419 = vpop.f32.mrb[0].mxu0
  %1420 = vmatprep.mubr.bf16.mxu0 0
  %1421 = vmatmul.mubr.bf16.gmra.mrb[0].mxu0 %v1220
  %v1422 = vpop.f32.mrb[0].mxu0
  %v1423 = vadd.f32 %v1015, %v1422
  %v1424 = vpop.f32.mrb[0].mxu0
  %v1425 = vpop.f32.mrb[0].mxu0
  %v1426 = vadd.f32 %v1015, %v1425
  %v1427 = vpop.f32.mrb[0].mxu0
  %1428 = vmatprep.mubr.bf16.mxu0 0
  %1429 = vmatmul.mubr.bf16.gmra.mrb[0].mxu0 %v1223
  %v1430 = vpop.f32.mrb[0].mxu0
  %v1431 = vadd.f32 %v1015, %v1430
  %v1432 = vpop.f32.mrb[0].mxu0
  %v1433 = vpop.f32.mrb[0].mxu0
  %v1434 = vadd.f32 %v1015, %v1433
  %v1435 = vpop.f32.mrb[0].mxu0
  %1436 = vmatprep.mubr.bf16.mxu0 0
  %1437 = vmatmul.mubr.bf16.gmra.mrb[0].mxu0 %v1226
  %v1438 = vpop.f32.mrb[0].mxu0
  %v1439 = vadd.f32 %v1015, %v1438
  %v1440 = vpop.f32.mrb[0].mxu0
  %v1441 = vpop.f32.mrb[0].mxu0
  %v1442 = vadd.f32 %v1015, %v1441
  %v1443 = vpop.f32.mrb[0].mxu0
  %1444 = vmatprep.mubr.bf16.mxu0 0
  %1445 = vmatmul.mubr.bf16.gmra.mrb[0].mxu0 %v1229
  %v1446 = vpop.f32.mrb[0].mxu0
  %v1447 = vadd.f32 %v1015, %v1446
  %v1448 = vpop.f32.mrb[0].mxu0
  %v1449 = vpop.f32.mrb[0].mxu0
  %v1450 = vadd.f32 %v1015, %v1449
  %v1451 = vpop.f32.mrb[0].mxu0
  %1452 = vmatprep.mubr.bf16.mxu0 0
  %1453 = vmatmul.mubr.bf16.gmra.mrb[0].mxu0 %v1232
  %v1454 = vpop.f32.mrb[0].mxu0
  %v1455 = vadd.f32 %v1015, %v1454
  %v1456 = vpop.f32.mrb[0].mxu0
  %v1457 = vpop.f32.mrb[0].mxu0
  %v1458 = vadd.f32 %v1015, %v1457
  %v1459 = vpop.f32.mrb[0].mxu0
  %1460 = vmatprep.mubr.bf16.mxu0 0
  %1461 = vmatmul.mubr.bf16.gmra.mrb[0].mxu0 %v1235
  %v1462 = vpop.f32.mrb[0].mxu0
  %v1463 = vadd.f32 %v1015, %v1462
  %v1464 = vpop.f32.mrb[0].mxu0
  %v1465 = vpop.f32.mrb[0].mxu0
  %v1466 = vadd.f32 %v1015, %v1465
  %v1467 = vpop.f32.mrb[0].mxu0
  %1468 = vmatprep.mubr.bf16.mxu0 0
  %1469 = vmatmul.mubr.bf16.gmra.mrb[0].mxu0 %v1238
  %v1470 = vpop.f32.mrb[0].mxu0
  %v1471 = vadd.f32 %v1015, %v1470
  %v1472 = vpop.f32.mrb[0].mxu0
  %v1473 = vpop.f32.mrb[0].mxu0
  %v1474 = vadd.f32 %v1015, %v1473
  %v1475 = vpop.f32.mrb[0].mxu0
  %1476 = vmatprep.mubr.bf16.mxu0 0
  %1477 = vmatmul.mubr.bf16.gmra.mrb[0].mxu0 %v1241
  %v1478 = vpop.f32.mrb[0].mxu0
  %v1479 = vadd.f32 %v1015, %v1478
  %v1480 = vpop.f32.mrb[0].mxu0
  %v1481 = vpop.f32.mrb[0].mxu0
  %v1482 = vadd.f32 %v1015, %v1481
  %v1483 = vpop.f32.mrb[0].mxu0
  %1484 = vmatprep.mubr.bf16.mxu0 0
  %1485 = vmatmul.mubr.bf16.gmra.mrb[0].mxu0 %v1244
  %v1486 = vpop.f32.mrb[0].mxu0
  %v1487 = vadd.f32 %v1015, %v1486
  %v1488 = vpop.f32.mrb[0].mxu0
  %v1489 = vpop.f32.mrb[0].mxu0
  %v1490 = vadd.f32 %v1015, %v1489
  %v1491 = vpop.f32.mrb[0].mxu0
  %1492 = vmatprep.mubr.bf16.mxu0 0
  %1493 = vmatmul.mubr.bf16.gmra.mrb[0].mxu0 %v1247
  %v1494 = vpop.f32.mrb[0].mxu0
  %v1495 = vadd.f32 %v1015, %v1494
  %v1496 = vpop.f32.mrb[0].mxu0
  %v1497 = vpop.f32.mrb[0].mxu0
  %v1498 = vadd.f32 %v1015, %v1497
  %v1499 = vpop.f32.mrb[0].mxu0
  %1500 = vmatprep.mubr.bf16.mxu0 0
  %1501 = vmatmul.mubr.bf16.gmra.mrb[0].mxu0 %v1250
  %v1502 = vpop.f32.mrb[0].mxu0
  %v1503 = vadd.f32 %v1015, %v1502
  %v1504 = vpop.f32.mrb[0].mxu0
  %v1505 = vpop.f32.mrb[0].mxu0
  %v1506 = vadd.f32 %v1015, %v1505
  %v1507 = vpop.f32.mrb[0].mxu0
  %1508 = vmatprep.mubr.bf16.mxu0 0
  %1509 = vmatmul.mubr.bf16.gmra.mrb[0].mxu0 %v1253
  %v1510 = vpop.f32.mrb[0].mxu0
  %v1511 = vadd.f32 %v1015, %v1510
  %v1512 = vpop.f32.mrb[0].mxu0
  %v1513 = vpop.f32.mrb[0].mxu0
  %v1514 = vadd.f32 %v1015, %v1513
  %v1515 = vpop.f32.mrb[0].mxu0
  %1516 = vmatprep.mubr.bf16.mxu0 0
  %1517 = vmatmul.mubr.bf16.gmra.mrb[0].mxu0 %v1256
  %v1518 = vpop.f32.mrb[0].mxu0
  %v1519 = vadd.f32 %v1015, %v1518
  %v1520 = vpop.f32.mrb[0].mxu0
  %v1521 = vpop.f32.mrb[0].mxu0
  %v1522 = vadd.f32 %v1015, %v1521
  %v1523 = vpop.f32.mrb[0].mxu0
  %1524 = vmatprep.mubr.bf16.mxu0 0
  %1525 = vmatmul.mubr.bf16.gmra.mrb[0].mxu0 %v1259
  %v1526 = vpop.f32.mrb[0].mxu0
  %v1527 = vadd.f32 %v1015, %v1526
  %v1528 = vpop.f32.mrb[0].mxu0
  %v1529 = vpop.f32.mrb[0].mxu0
  %v1530 = vadd.f32 %v1015, %v1529
  %v1531 = vpop.f32.mrb[0].mxu0
  %1532 = vmatprep.mubr.bf16.mxu0 0
  %1533 = vmatmul.mubr.bf16.gmra.mrb[0].mxu0 %v1262
  %v1534 = vpop.f32.mrb[0].mxu0
  %v1535 = vadd.f32 %v1015, %v1534
  %v1536 = vpop.f32.mrb[0].mxu0
  %v1537 = vpop.f32.mrb[0].mxu0
  %v1538 = vadd.f32 %v1015, %v1537
  %v1539 = vpop.f32.mrb[0].mxu0
  %1540 = vmatprep.mubr.bf16.mxu0 0
  %1541 = vmatmul.mubr.bf16.gmra.mrb[0].mxu0 %v1265
  %v1542 = vpop.f32.mrb[0].mxu0
  %v1543 = vadd.f32 %v1015, %v1542
  %v1544 = vpop.f32.mrb[0].mxu0
  %v1545 = vpop.f32.mrb[0].mxu0
  %v1546 = vadd.f32 %v1015, %v1545
  %v1547 = vpop.f32.mrb[0].mxu0
  %1548 = vmatprep.mubr.bf16.mxu0 0
  %1549 = vmatmul.mubr.bf16.gmra.mrb[0].mxu0 %v1268
  %v1550 = vpop.f32.mrb[0].mxu0
  %v1551 = vadd.f32 %v1015, %v1550
  %v1552 = vpop.f32.mrb[0].mxu0
  %v1553 = vpop.f32.mrb[0].mxu0
  %v1554 = vadd.f32 %v1015, %v1553
  %v1555 = vpop.f32.mrb[0].mxu0
  %1556 = vmatprep.mubr.bf16.mxu0 0
  %1557 = vmatmul.mubr.bf16.gmra.mrb[0].mxu0 %v1271
  %v1558 = vpop.f32.mrb[0].mxu0
  %v1559 = vadd.f32 %v1015, %v1558
  %v1560 = vpop.f32.mrb[0].mxu0
  %v1561 = vpop.f32.mrb[0].mxu0
  %v1562 = vadd.f32 %v1015, %v1561
  %v1563 = vpop.f32.mrb[0].mxu0
  %1564 = vdwg.mxu0
  %v1565 = vmax.f32 %v1311, 0.0
  %v1566 = vmax.f32 %v1314, 0.0
  %v1567 = vmax.f32 %v1319, 0.0
  %v1568 = vmax.f32 %v1322, 0.0
  %v1569 = vmax.f32 %v1327, 0.0
  %v1570 = vmax.f32 %v1330, 0.0
  %v1571 = vmax.f32 %v1335, 0.0
  %v1572 = vmax.f32 %v1338, 0.0
  %v1573 = vmax.f32 %v1343, 0.0
  %v1574 = vmax.f32 %v1346, 0.0
  %v1575 = vmax.f32 %v1351, 0.0
  %v1576 = vmax.f32 %v1354, 0.0
  %v1577 = vmax.f32 %v1359, 0.0
  %v1578 = vmax.f32 %v1362, 0.0
  %v1579 = vmax.f32 %v1367, 0.0
  %v1580 = vmax.f32 %v1370, 0.0
  %v1581 = vmax.f32 %v1375, 0.0
  %v1582 = vmax.f32 %v1378, 0.0
  %v1583 = vmax.f32 %v1383, 0.0
  %v1584 = vmax.f32 %v1386, 0.0
  %v1585 = vmax.f32 %v1391, 0.0
  %v1586 = vmax.f32 %v1394, 0.0
  %v1587 = vmax.f32 %v1399, 0.0
  %v1588 = vmax.f32 %v1402, 0.0
  %v1589 = vmax.f32 %v1407, 0.0
  %v1590 = vmax.f32 %v1410, 0.0
  %v1591 = vmax.f32 %v1415, 0.0
  %v1592 = vmax.f32 %v1418, 0.0
  %v1593 = vmax.f32 %v1423, 0.0
  %v1594 = vmax.f32 %v1426, 0.0
  %v1595 = vmax.f32 %v1431, 0.0
  %v1596 = vmax.f32 %v1434, 0.0
  %v1597 = vmax.f32 %v1439, 0.0
  %v1598 = vmax.f32 %v1442, 0.0
  %v1599 = vmax.f32 %v1447, 0.0
  %v1600 = vmax.f32 %v1450, 0.0
  %v1601 = vmax.f32 %v1455, 0.0
  %v1602 = vmax.f32 %v1458, 0.0
  %v1603 = vmax.f32 %v1463, 0.0
  %v1604 = vmax.f32 %v1466, 0.0
  %v1605 = vmax.f32 %v1471, 0.0
  %v1606 = vmax.f32 %v1474, 0.0
  %v1607 = vmax.f32 %v1479, 0.0
  %v1608 = vmax.f32 %v1482, 0.0
  %v1609 = vmax.f32 %v1487, 0.0
  %v1610 = vmax.f32 %v1490, 0.0
  %v1611 = vmax.f32 %v1495, 0.0
  %v1612 = vmax.f32 %v1498, 0.0
  %v1613 = vmax.f32 %v1503, 0.0
  %v1614 = vmax.f32 %v1506, 0.0
  %v1615 = vmax.f32 %v1511, 0.0
  %v1616 = vmax.f32 %v1514, 0.0
  %v1617 = vmax.f32 %v1519, 0.0
  %v1618 = vmax.f32 %v1522, 0.0
  %v1619 = vmax.f32 %v1527, 0.0
  %v1620 = vmax.f32 %v1530, 0.0
  %v1621 = vmax.f32 %v1535, 0.0
  %v1622 = vmax.f32 %v1538, 0.0
  %v1623 = vmax.f32 %v1543, 0.0
  %v1624 = vmax.f32 %v1546, 0.0
  %v1625 = vmax.f32 %v1551, 0.0
  %v1626 = vmax.f32 %v1554, 0.0
  %v1627 = vmax.f32 %v1559, 0.0
  %v1628 = vmax.f32 %v1562, 0.0
  %v1629 = vsel %vm732, %v1565, 0.0
  %v1630 = vsel %vm732, %v1566, 0.0
  %v1631 = vadd.f32 %v1629, %v1630
  %v1632 = vsel %vm732, %v1567, 0.0
  %v1633 = vadd.f32 %v1631, %v1632
  %v1634 = vsel %vm732, %v1568, 0.0
  %v1635 = vadd.f32 %v1633, %v1634
  %v1636 = vsel %vm732, %v1569, 0.0
  %v1637 = vadd.f32 %v1635, %v1636
  %v1638 = vsel %vm732, %v1570, 0.0
  %v1639 = vadd.f32 %v1637, %v1638
  %v1640 = vsel %vm732, %v1571, 0.0
  %v1641 = vadd.f32 %v1639, %v1640
  %v1642 = vsel %vm732, %v1572, 0.0
  %v1643 = vadd.f32 %v1641, %v1642
  %v1644 = vsel %vm732, %v1573, 0.0
  %v1645 = vadd.f32 %v1643, %v1644
  %v1646 = vsel %vm732, %v1574, 0.0
  %v1647 = vadd.f32 %v1645, %v1646
  %v1648 = vsel %vm732, %v1575, 0.0
  %v1649 = vadd.f32 %v1647, %v1648
  %v1650 = vsel %vm732, %v1576, 0.0
  %v1651 = vadd.f32 %v1649, %v1650
  %v1652 = vsel %vm732, %v1577, 0.0
  %v1653 = vadd.f32 %v1651, %v1652
  %v1654 = vsel %vm732, %v1578, 0.0
  %v1655 = vadd.f32 %v1653, %v1654
  %v1656 = vsel %vm732, %v1579, 0.0
  %v1657 = vadd.f32 %v1655, %v1656
  %v1658 = vsel %vm732, %v1580, 0.0
  %v1659 = vadd.f32 %v1657, %v1658
  %v1660 = vsel %vm732, %v1581, 0.0
  %v1661 = vadd.f32 %v1659, %v1660
  %v1662 = vsel %vm732, %v1582, 0.0
  %v1663 = vadd.f32 %v1661, %v1662
  %v1664 = vsel %vm732, %v1583, 0.0
  %v1665 = vadd.f32 %v1663, %v1664
  %v1666 = vsel %vm732, %v1584, 0.0
  %v1667 = vadd.f32 %v1665, %v1666
  %v1668 = vsel %vm732, %v1585, 0.0
  %v1669 = vadd.f32 %v1667, %v1668
  %v1670 = vsel %vm732, %v1586, 0.0
  %v1671 = vadd.f32 %v1669, %v1670
  %v1672 = vsel %vm732, %v1587, 0.0
  %v1673 = vadd.f32 %v1671, %v1672
  %v1674 = vsel %vm732, %v1588, 0.0
  %v1675 = vadd.f32 %v1673, %v1674
  %v1676 = vsel %vm732, %v1589, 0.0
  %v1677 = vadd.f32 %v1675, %v1676
  %v1678 = vsel %vm732, %v1590, 0.0
  %v1679 = vadd.f32 %v1677, %v1678
  %v1680 = vsel %vm732, %v1591, 0.0
  %v1681 = vadd.f32 %v1679, %v1680
  %v1682 = vsel %vm732, %v1592, 0.0
  %v1683 = vadd.f32 %v1681, %v1682
  %v1684 = vsel %vm732, %v1593, 0.0
  %v1685 = vadd.f32 %v1683, %v1684
  %v1686 = vsel %vm732, %v1594, 0.0
  %v1687 = vadd.f32 %v1685, %v1686
  %v1688 = vsel %vm732, %v1595, 0.0
  %v1689 = vadd.f32 %v1687, %v1688
  %v1690 = vsel %vm732, %v1596, 0.0
  %v1691 = vadd.f32 %v1689, %v1690
  %v1692 = vrot.slane %v1691, 4
  %v1693 = vadd.f32 %v1691, %v1692
  %v1694 = vrot.slane %v1693, 2
  %v1695 = vadd.f32 %v1693, %v1694
  %v1696 = vrot.slane %v1695, 1
  %v1697 = vadd.f32 %v1695, %v1696
  %v1698 = vsel %vm732, %v1597, 0.0
  %v1699 = vsel %vm732, %v1598, 0.0
  %v1700 = vadd.f32 %v1698, %v1699
  %v1701 = vsel %vm732, %v1599, 0.0
  %v1702 = vadd.f32 %v1700, %v1701
  %v1703 = vsel %vm732, %v1600, 0.0
  %v1704 = vadd.f32 %v1702, %v1703
  %v1705 = vsel %vm732, %v1601, 0.0
  %v1706 = vadd.f32 %v1704, %v1705
  %v1707 = vsel %vm732, %v1602, 0.0
  %v1708 = vadd.f32 %v1706, %v1707
  %v1709 = vsel %vm732, %v1603, 0.0
  %v1710 = vadd.f32 %v1708, %v1709
  %v1711 = vsel %vm732, %v1604, 0.0
  %v1712 = vadd.f32 %v1710, %v1711
  %v1713 = vsel %vm732, %v1605, 0.0
  %v1714 = vadd.f32 %v1712, %v1713
  %v1715 = vsel %vm732, %v1606, 0.0
  %v1716 = vadd.f32 %v1714, %v1715
  %v1717 = vsel %vm732, %v1607, 0.0
  %v1718 = vadd.f32 %v1716, %v1717
  %v1719 = vsel %vm732, %v1608, 0.0
  %v1720 = vadd.f32 %v1718, %v1719
  %v1721 = vsel %vm732, %v1609, 0.0
  %v1722 = vadd.f32 %v1720, %v1721
  %v1723 = vsel %vm732, %v1610, 0.0
  %v1724 = vadd.f32 %v1722, %v1723
  %v1725 = vsel %vm732, %v1611, 0.0
  %v1726 = vadd.f32 %v1724, %v1725
  %v1727 = vsel %vm732, %v1612, 0.0
  %v1728 = vadd.f32 %v1726, %v1727
  %v1729 = vsel %vm732, %v1613, 0.0
  %v1730 = vadd.f32 %v1728, %v1729
  %v1731 = vsel %vm732, %v1614, 0.0
  %v1732 = vadd.f32 %v1730, %v1731
  %v1733 = vsel %vm732, %v1615, 0.0
  %v1734 = vadd.f32 %v1732, %v1733
  %v1735 = vsel %vm732, %v1616, 0.0
  %v1736 = vadd.f32 %v1734, %v1735
  %v1737 = vsel %vm732, %v1617, 0.0
  %v1738 = vadd.f32 %v1736, %v1737
  %v1739 = vsel %vm732, %v1618, 0.0
  %v1740 = vadd.f32 %v1738, %v1739
  %v1741 = vsel %vm732, %v1619, 0.0
  %v1742 = vadd.f32 %v1740, %v1741
  %v1743 = vsel %vm732, %v1620, 0.0
  %v1744 = vadd.f32 %v1742, %v1743
  %v1745 = vsel %vm732, %v1621, 0.0
  %v1746 = vadd.f32 %v1744, %v1745
  %v1747 = vsel %vm732, %v1622, 0.0
  %v1748 = vadd.f32 %v1746, %v1747
  %v1749 = vsel %vm732, %v1623, 0.0
  %v1750 = vadd.f32 %v1748, %v1749
  %v1751 = vsel %vm732, %v1624, 0.0
  %v1752 = vadd.f32 %v1750, %v1751
  %v1753 = vsel %vm732, %v1625, 0.0
  %v1754 = vadd.f32 %v1752, %v1753
  %v1755 = vsel %vm732, %v1626, 0.0
  %v1756 = vadd.f32 %v1754, %v1755
  %v1757 = vsel %vm732, %v1627, 0.0
  %v1758 = vadd.f32 %v1756, %v1757
  %v1759 = vsel %vm732, %v1628, 0.0
  %v1760 = vadd.f32 %v1758, %v1759
  %v1761 = vrot.slane %v1760, 4
  %v1762 = vadd.f32 %v1760, %v1761
  %v1763 = vrot.slane %v1762, 2
  %v1764 = vadd.f32 %v1762, %v1763
  %v1765 = vrot.slane %v1764, 1
  %v1766 = vadd.f32 %v1764, %v1765
  %v1767 = vmul.f32 %v1697, 0.00390625
  %v1768 = vmul.f32 %v1766, 0.00390625
  %v1769 = vpack.c.bf16 %v1767, %v1767
  %v1770 = vpack.c.bf16 %v1768, %v1768
  %v1771 = vld [vmem:[%s8] sm:$0xff]
  %v1772 = vpack.c.bf16 %v1771, %v1771
  %v1773 = vld [vmem:[%s9] sm:$0x1]
  %v1775 = vlaneseq
  %v1776 = vshrl.u32 %v1775, 7
  %v1777 = vsub.s32 0, %v1776
  %v1778 = vrot.slane %v1773, %v1777
  %v1782 = vunpack.c.l.b16 %v1769
  %v1783 = vunpack.c.l.b16 %v1770
  %v1784 = vsel %vm888, %v1783, %v1782
  %v1785 = vpack.c.b16 %v1784, %v1784
  %v1787 = vsel %vm732, %v1785, 0
  %v1790 = vsel %vm894, %v1772, 0
  %1792 = vmatprep.subr.bf16.mxu0 0
  %1793 = vmatpush1.bf16.msra.mxu0 %v1790
  %1794 = vmatprep.subr.bf16.mxu0 0
  %1795 = vmatpush1.bf16.msra.mxu0 0
  %1796 = vmatprep.subr.bf16.mxu0 0
  %1797 = vmatpush1.bf16.msra.mxu0 0
  %1798 = vmatprep.subr.bf16.mxu0 0
  %1799 = vmatpush1.bf16.msra.mxu0 0
  %1800 = vmatprep.subr.bf16.mxu0 0
  %1801 = vmatpush1.bf16.msra.mxu0 0
  %1802 = vmatprep.subr.bf16.mxu0 0
  %1803 = vmatpush1.bf16.msra.mxu0 0
  %1804 = vmatprep.subr.bf16.mxu0 0
  %1805 = vmatpush1.bf16.msra.mxu0 0
  %1806 = vmatprep.subr.bf16.mxu0 0
  %1807 = vmatpush1.bf16.msra.mxu0 0
  %1808 = vmatprep.subr.bf16.mxu0 0
  %1809 = vmatpush1.bf16.msra.mxu0 0
  %1810 = vmatprep.subr.bf16.mxu0 0
  %1811 = vmatpush1.bf16.msra.mxu0 0
  %1812 = vmatprep.subr.bf16.mxu0 0
  %1813 = vmatpush1.bf16.msra.mxu0 0
  %1814 = vmatprep.subr.bf16.mxu0 0
  %1815 = vmatpush1.bf16.msra.mxu0 0
  %1816 = vmatprep.subr.bf16.mxu0 0
  %1817 = vmatpush1.bf16.msra.mxu0 0
  %1818 = vmatprep.subr.bf16.mxu0 0
  %1819 = vmatpush1.bf16.msra.mxu0 0
  %1820 = vmatprep.subr.bf16.mxu0 0
  %1821 = vmatpush1.bf16.msra.mxu0 0
  %1822 = vmatprep.subr.bf16.mxu0 0
  %1823 = vmatpush1.bf16.msra.mxu0 0
  %1824 = vmatprep.mubr.bf16.mxu0 0
  %1825 = vmatmul.mubr.bf16.gmra.mrb[0].mxu0 %v1787
  %v1826 = vpop.f32.mrb[0].mxu0
  %v1827 = vadd.f32 %v1778, %v1826
  %v1828 = vpop.f32.mrb[0].mxu0
  %v1829 = vpop.f32.mrb[0].mxu0
  %v1830 = vpop.f32.mrb[0].mxu0
  %1831 = vdwg.mxu0
  %v1832 = vmul.f32 %v933, %v933
  %vm1833 = vcmask 254976
  %v1834 = vsel %vm1833, %v1832, 0.0
  %1835 = vadd.xlane.f32.xlu0 %v1834
  %v1836 = vpop.xlane.xlu0 %1835
  %v1837 = vmax.f32 %v1836, 1e-24
  %v1838 = vrsqrt.pop %v1837
  %v1839 = vmul.f32 %v933, %v1838
  %v1840 = vmul.f32 %v1827, %v1827
  %v1841 = vsel %vm1833, %v1840, 0.0
  %1842 = vadd.xlane.f32.xlu0 %v1841
  %v1843 = vpop.xlane.xlu0 %1842
  %v1844 = vmax.f32 %v1843, 1e-24
  %v1845 = vrsqrt.pop %v1844
  %v1846 = vmul.f32 %v1827, %v1845
  %v1847 = vmul.f32 %v1839, 14.285714
  %v1848 = vmul.f32 %v1847, %v1846
  %v1849 = vsel %vm1833, %v1848, 0.0
  %1850 = vadd.xlane.f32.xlu0 %v1849
  %v1851 = vpop.xlane.xlu0 %1850
  %1852 = vst [vmem:[%s10] sm:$0x3] %v1851
  %v1853 = vpack.c.bf16 %v1847, %v1847
  %vm1854 = vcmask 253952
  %1855 = vst.msk [vmem:[%s11] sm:$0x1] %vm1854, %v1853
  %v1856 = vpack.c.bf16 %v1846, %v1846
  %1857 = vst.msk [vmem:[%s12] sm:$0x1] %vm1854, %v1856
  // Predicated region
  $region42: #{moco_forward.2} parent=0 // pred_check
    _
  $region43: #{moco_forward.2} parent=0 // pred_check_branch
    %1859 = sbr.rel (0) target = $region45
  $region44: #{moco_forward.2} parent=0 // pred_region
    _
  $region45: #{moco_forward.2} parent=0 // pred_fallthru
    _
  // Predicated region
  $region46: #{moco_forward.2} parent=0 // pred_check
    _
  $region47: #{moco_forward.2} parent=0 // pred_check_branch
    %1861 = sbr.rel (0) target = $region49
  $region48: #{moco_forward.2} parent=0 // pred_region
    _
  $region49: #{moco_forward.2} parent=0 // pred_fallthru
    _
  // Predicated region
  $region50: #{moco_forward.2} parent=0 // pred_check
    _
  $region51: #{moco_forward.2} parent=0 // pred_check_branch
    %1863 = sbr.rel (0) target = $region53
  $region52: #{moco_forward.2} parent=0 // pred_region
    _
  $region53: #{moco_forward.2} parent=0 // pred_fallthru
    _
  // Predicated region
  $region54: #{moco_forward.2} parent=0 // pred_check
    _
  $region55: #{moco_forward.2} parent=0 // pred_check_branch
    %1865 = sbr.rel (0) target = $region57
  $region56: #{moco_forward.2} parent=0 // pred_region
    _
  $region57: #{moco_forward.2} parent=0 // pred_fallthru
    _
  // Predicated region
  $region58: #{moco_forward.2} parent=0 // pred_check
    _
  $region59: #{moco_forward.2} parent=0 // pred_check_branch
    %1867 = sbr.rel (0) target = $region61
  $region60: #{moco_forward.2} parent=0 // pred_region
    _
  $region61: #{moco_forward.2} parent=0 // pred_fallthru
    _
  // Predicated region
  $region62: #{moco_forward.2} parent=0 // pred_check
    _
  $region63: #{moco_forward.2} parent=0 // pred_check_branch
    %1869 = sbr.rel (0) target = $region65
  $region64: #{moco_forward.2} parent=0 // pred_region
    _
  $region65: #{moco_forward.2} parent=0 // pred_fallthru
    _

</llo_original>
